<compile_context>
chip_gen: v6e
topology: v6e:2x2x1
jax: 0.10.0
libtpu: 0.0.40
codegen_flags: <defaults>
</compile_context>

<pallas_src>
import numpy as np
import jax
import jax.numpy as jnp
from jax import lax
from jax.experimental import pallas as pl
from jax.experimental.pallas import tpu as pltpu

D = 32          # encoder output / pointer-LSTM input dim
H = 32          # pointer-net hidden dim
N_HOP = 1       # LSTMPointerNet default
MAX_MEM = 64    # max (num_sents + 2), padded & masked inside the kernel
MAX_STEPS = 128 # decode bound (original logic forces stop by step 112)

VMEM_SPEC = pl.BlockSpec(memory_space=pltpu.MemorySpace.VMEM)
SMEM_SPEC = pl.BlockSpec(memory_space=pltpu.MemorySpace.SMEM)


# ----------------------------------------------------------------------------
# in-kernel helpers (all shapes lane-major: M on lanes)
# ----------------------------------------------------------------------------
def _lstm_cell(x, h, c, wih, whh, b):
    """nn.LSTMCell. x:(1,D) h,c:(1,H) wih:(D,4H) whh:(H,4H) b:(1,4H)."""
    gates = (jnp.dot(x, wih, preferred_element_type=jnp.float32)
             + jnp.dot(h, whh, preferred_element_type=jnp.float32) + b)
    i = jax.nn.sigmoid(gates[:, 0:H])
    f = jax.nn.sigmoid(gates[:, H:2 * H])
    g = jnp.tanh(gates[:, 2 * H:3 * H])
    o = jax.nn.sigmoid(gates[:, 3 * H:4 * H])
    c_new = f * c + i * g
    return o * jnp.tanh(c_new), c_new


def _query_col(w_t, q):
    """(H_out,H_k) x (1,H_k) -> (H_out,1) column, A @ B^T pattern on the MXU."""
    return lax.dot_general(w_t, q, (((1,), (1,)), ((), ())),
                           preferred_element_type=jnp.float32)


def _masked_softmax_row(e, valid):
    """lane softmax of (1, M) row with invalid lanes masked to exact zero."""
    e = jnp.where(valid, e, -1e30)
    m = jnp.max(e, axis=1, keepdims=True)
    p = jnp.where(valid, jnp.exp(e - m), 0.0)
    den = jnp.sum(p, axis=1, keepdims=True)
    return p * pl.reciprocal(den, approx=False)


def _attn_score_row(query, wq_t, v_row, feat_t):
    """(1,M) unnormalized pointer/attention scores: v^T tanh(feat_T + Wq^T q^T)."""
    s = jnp.tanh(feat_t + _query_col(wq_t, query))                    # (H, M)
    return jnp.dot(v_row, s, preferred_element_type=jnp.float32)     # (1, M)


def _attend(query, wq_t, v_row, feat_t, ctx, valid):
    """attention context: softmax_lane(score) @ ctx  -> (1, ctx_dim)."""
    p = _masked_softmax_row(_attn_score_row(query, wq_t, v_row, feat_t), valid)
    return jnp.dot(p, ctx, preferred_element_type=jnp.float32)


# ----------------------------------------------------------------------------
# fused kernel: actor greedy decode (early exit) + critic rollout (dynamic trip)
# ----------------------------------------------------------------------------
def _actor_critic_kernel(
        dims_ref, labels_sm_ref,                                   # SMEM inputs
        labels_row_ref, enc_ref, enc_t_ref, trunc_row_ref, stop_row_ref,
        trunc_col_ref, stop_col_ref, hop_wm_ref, wm_cat_t_ref,
        wih_ref, whh_ref, b_ref, hop_wq_t_ref, hop_v_ref,
        attn_wq_t_ref, attn_v_ref, wsc_ref, bsc_ref,
        init_i_ref, init_h_ref, init_c_ref,                        # VMEM inputs
        out_idx_ref, n_out_ref, scores_ref,                        # SMEM outputs
        mem_s, hop_feat_s, attn_feat_t_s, hop_feat_t_s,
        h_s, c_s, x_s, selected_s, sel_s, sc_s):                   # scratch
    n = dims_ref[0]
    trunc_i = n
    stop_i = n + 1

    # loop-invariant lane-layout masks / iota (single vreg each)
    cid = lax.broadcasted_iota(jnp.int32, (1, MAX_MEM), 1)
    cid_f = cid.astype(jnp.float32)
    valid_a = cid < (n + 2)          # actor: sentences + truncate + stop
    valid_c = cid < n                # critic & window mask: sentences only
    trunc_hot = cid == trunc_i
    stop_hot = cid == stop_i
    rid = lax.broadcasted_iota(jnp.int32, (MAX_MEM, 1), 0)

    # memory in both layouts + attention features (one-time prelude)
    mem = jnp.where(rid == trunc_i, trunc_row_ref[...],
                    jnp.where(rid == stop_i, stop_row_ref[...], enc_ref[...]))
    mem_s[...] = mem                                               # (M, D) rows
    hop_feat_s[...] = jnp.dot(mem, hop_wm_ref[...],
                              preferred_element_type=jnp.float32)  # (M, H)
    mem_t = jnp.where(trunc_hot, trunc_col_ref[...],
                      jnp.where(stop_hot, stop_col_ref[...], enc_t_ref[...]))
    feats_t = jnp.dot(wm_cat_t_ref[...], mem_t,
                      preferred_element_type=jnp.float32)          # (2H, M)
    attn_feat_t_s[...] = feats_t[0:H, :]
    hop_feat_t_s[...] = feats_t[H:2 * H, :]

    # loop-invariant weight loads hoisted out of both loops
    wih = wih_ref[...]
    whh = whh_ref[...]
    bias = b_ref[...]
    hop_wq_t = hop_wq_t_ref[...]
    attn_wq_t = attn_wq_t_ref[...]
    hop_v = hop_v_ref[...]
    attn_v = attn_v_ref[...]
    w_sc = wsc_ref[...]
    b_sc = bsc_ref[...]
    labels_row = labels_row_ref[...]

    # ------------------ actor: greedy pointer decode, early exit -------------
    h_s[...] = init_h_ref[...]
    c_s[...] = init_c_ref[...]
    x_s[...] = init_i_ref[...]
    selected_s[...] = jnp.zeros_like(selected_s)

    def _cond(carry):
        t, _, _, done = carry
        return jnp.logical_and(t < MAX_STEPS, done == 0)

    def _body(carry):
        t, flag, center, done = carry
        h_new, c_new = _lstm_cell(x_s[...], h_s[...], c_s[...], wih, whh, bias)
        h_s[...] = h_new
        c_s[...] = c_new

        # hop (glimpse) attention over full memory (sentences + truncate + stop)
        query = h_new
        for _ in range(N_HOP):
            query = _attend(query, hop_wq_t, hop_v, hop_feat_t_s[...],
                            hop_feat_s[...], valid_a)

        # pointer scores, lane layout (1, M)
        score = _attn_score_row(query, attn_wq_t, attn_v, attn_feat_t_s[...])

        # masking (matches PtrExtractorRL.forward greedy/eval path)
        score = jnp.where(selected_s[...] > 0.5, -1e18, score)
        window_bad = jnp.logical_and(jnp.abs(labels_row - center) > 1000, valid_c)
        score = jnp.where(jnp.logical_and(flag == 1, window_bad), -1e18, score)
        score = jnp.where(jnp.logical_and(t > 100, trunc_hot), -1e18, score)
        score = jnp.where(jnp.logical_and(t > 110, stop_hot), 1e8, score)
        score = jnp.where(valid_a, score, -1e30)   # padded lanes never win

        # argmax (first maximal lane)
        mx = jnp.max(score, axis=1, keepdims=True)
        idx_f = jnp.min(jnp.where(score >= mx, cid_f, 1e9), axis=1, keepdims=True)
        sel_s[...] = idx_f.astype(jnp.int32)
        out = sel_s[0, 0]                           # scalar i32

        out_idx_ref[t] = out                        # scalar SMEM store
        selected_s[...] = jnp.where(
            jnp.logical_and(cid == out, out != trunc_i), 1.0, selected_s[...])
        x_s[...] = mem_s[pl.ds(out, 1), :]          # dynamic row load (1, D)

        is_trunc = out == trunc_i
        is_stop = out == stop_i
        start_group = jnp.logical_and(
            jnp.logical_not(is_trunc),
            jnp.logical_and(flag == 0, jnp.logical_not(is_stop)))
        new_flag = jnp.where(is_trunc, 0, jnp.where(start_group, 1, flag))
        new_center = jnp.where(start_group, labels_sm_ref[out], center)
        new_done = jnp.where(is_stop, 1, done)
        return (t + 1, new_flag.astype(jnp.int32),
                new_center.astype(jnp.int32), new_done.astype(jnp.int32))

    n_step, _, _, _ = lax.while_loop(
        _cond, _body,
        (jnp.array(0, jnp.int32), jnp.array(0, jnp.int32),
         jnp.array(-1, jnp.int32), jnp.array(0, jnp.int32)))
    n_out_ref[0] = n_step

    # ------------------ critic: PtrScorer rollout, n_step from the decode ----
    h_s[...] = init_h_ref[...]
    c_s[...] = init_c_ref[...]
    x_s[...] = init_i_ref[...]

    @pl.loop(0, n_step)
    def _critic_step(t):
        h_new, c_new = _lstm_cell(x_s[...], h_s[...], c_s[...], wih, whh, bias)
        h_s[...] = h_new
        c_s[...] = c_new
        query = h_new
        for _ in range(N_HOP):
            query = _attend(query, hop_wq_t, hop_v, hop_feat_t_s[...],
                            hop_feat_s[...], valid_c)
        output = _attend(query, attn_wq_t, attn_v, attn_feat_t_s[...],
                         mem_s[...], valid_c)                      # (1, D)
        sc_s[...] = (jnp.dot(output, w_sc, preferred_element_type=jnp.float32)
                     + b_sc)
        scores_ref[t] = sc_s[0, 0]                                 # scalar SMEM store
        x_s[...] = output


_FUSED_CALL = pl.pallas_call(
    _actor_critic_kernel,
    out_shape=(jax.ShapeDtypeStruct((MAX_STEPS,), jnp.int32),    # selected indices
               jax.ShapeDtypeStruct((1,), jnp.int32),            # n_out
               jax.ShapeDtypeStruct((MAX_STEPS,), jnp.float32)), # critic scores
    in_specs=[SMEM_SPEC, SMEM_SPEC] + [VMEM_SPEC] * 21,
    out_specs=(SMEM_SPEC, SMEM_SPEC, SMEM_SPEC),
    scratch_shapes=[
        pltpu.VMEM((MAX_MEM, D), jnp.float32),    # mem_s        (rows)
        pltpu.VMEM((MAX_MEM, H), jnp.float32),    # hop_feat_s   (rows, for ctx matmul)
        pltpu.VMEM((H, MAX_MEM), jnp.float32),    # attn_feat_t_s (lane-major)
        pltpu.VMEM((H, MAX_MEM), jnp.float32),    # hop_feat_t_s  (lane-major)
        pltpu.VMEM((1, H), jnp.float32),          # h_s
        pltpu.VMEM((1, H), jnp.float32),          # c_s
        pltpu.VMEM((1, D), jnp.float32),          # x_s
        pltpu.VMEM((1, MAX_MEM), jnp.float32),    # selected_s (lane-major)
        pltpu.VMEM((1, 1), jnp.int32),            # sel_s (scalar staging)
        pltpu.VMEM((1, 1), jnp.float32),          # sc_s  (scalar staging)
    ],
)


# ----------------------------------------------------------------------------
# host wrapper: single kernel call, single device round-trip
# ----------------------------------------------------------------------------
def group_extracts(seq, truncate, stop):
    groups, tmp = [], []
    for e in seq:
        tmp.append(e)
        if e == truncate or e == stop:
            groups.append(tmp)
            tmp = []
    if tmp:
        groups.append(tmp)
    return groups


def actor_critic_forward(enc_art, sent_labels, params):
    """Fused actor decode + critic rollout. Returns (seq, grouped extracts, scores)."""
    n = int(enc_art.shape[0])
    assert n + 2 <= MAX_MEM
    enc_pad = np.zeros((MAX_MEM, D), np.float32)
    enc_pad[:n] = np.asarray(enc_art, np.float32)
    enc_pad_t = np.ascontiguousarray(enc_pad.T)                    # (D, MAX_MEM)
    labels = np.zeros((MAX_MEM,), np.int32)
    labels[:n] = np.asarray(sent_labels, np.int32)
    labels_row = labels.reshape(1, MAX_MEM)
    dims = np.array([n], np.int32)

    trunc = np.asarray(params["truncate"], np.float32)
    stop = np.asarray(params["stop"], np.float32)

    out_idx, n_out, scores = _FUSED_CALL(
        dims, labels, labels_row, enc_pad, enc_pad_t,
        trunc.reshape(1, D), stop.reshape(1, D),
        trunc.reshape(D, 1), stop.reshape(D, 1),
        params["hop_wm"], params["wm_cat_T"],
        params["wih_t"], params["whh_t"], params["b"],
        params["hop_wq_T"], params["hop_v_row"],
        params["attn_wq_T"], params["attn_v_row"],
        params["w_score"], params["b_score"],
        params["init_i"], params["init_h"], params["init_c"])
    jax.block_until_ready((out_idx, n_out, scores))

    n_out = int(np.asarray(n_out)[0])
    seq = [int(v) for v in np.asarray(out_idx)[:n_out]]
    extracts = group_extracts(seq, n, n + 1)
    scores = np.asarray(scores)[:n_out]
    return seq, extracts, scores


# ----------------------------------------------------------------------------
# deterministic parameter construction (shapes from LSTMPointerNet, n_layer=1)
# ----------------------------------------------------------------------------
def make_params(key):
    ks = jax.random.split(key, 18)
    r = lambda k, s: (jax.random.normal(k, s, jnp.float32) * 0.1)
    params = {
        "attn_wm": r(ks[0], (D, H)),
        "attn_wq": r(ks[1], (H, H)),
        "attn_v":  r(ks[2], (H, 1)),
        "hop_wm":  r(ks[3], (D, H)),
        "hop_wq":  r(ks[4], (H, H)),
        "hop_v":   r(ks[5], (H, 1)),
        "init_h":  r(ks[6], (1, H)),
        "init_c":  r(ks[7], (1, H)),
        "init_i":  r(ks[8], (1, D)),
        "wih_t":   r(ks[9], (D, 4 * H)),                 # LSTMCell W_ih^T
        "whh_t":   r(ks[10], (H, 4 * H)),                # LSTMCell W_hh^T
        "b":       r(ks[11], (1, 4 * H)),                # b_ih + b_hh combined
        "truncate": r(ks[12], (D,)),
        "stop":     r(ks[13], (D,)),
        "w_score":  r(ks[14], (D, 1)),                   # _score_linear weight^T
        "b_score":  r(ks[15], (1, 1)),
    }
    # kernel-side layouts: transposed feature projection, transposed query mats,
    # row-form v vectors (lane layout).
    params["wm_cat_T"] = jnp.concatenate(
        [params["attn_wm"].T, params["hop_wm"].T], axis=0)          # (2H, D)
    params["hop_wq_T"] = params["hop_wq"].T
    params["attn_wq_T"] = params["attn_wq"].T
    params["hop_v_row"] = params["hop_v"].reshape(1, H)
    params["attn_v_row"] = params["attn_v"].reshape(1, H)
    return params


# ----------------------------------------------------------------------------
# pure-jnp references (no Pallas) for numerical validation
# ----------------------------------------------------------------------------
def _lstm_cell_ref(x, h, c, wih_t, whh_t, b):
    gates = x @ wih_t + h @ whh_t + b
    i = jax.nn.sigmoid(gates[:, 0:H])
    f = jax.nn.sigmoid(gates[:, H:2 * H])
    g = jnp.tanh(gates[:, 2 * H:3 * H])
    o = jax.nn.sigmoid(gates[:, 3 * H:4 * H])
    c_new = f * c + i * g
    return o * jnp.tanh(c_new), c_new


def _attn_score_ref(feat, q, wq, v):
    return jnp.tanh(feat + q @ wq) @ v


def _attn_context_ref(feat, ctx, q, wq, v):
    p = jax.nn.softmax(_attn_score_ref(feat, q, wq, v), axis=0)
    return jnp.sum(p * ctx, axis=0, keepdims=True)


def ref_actor_decode(enc_art, sent_labels, params):
    n = enc_art.shape[0]
    truncate, stop = n, n + 1
    attn_mem = jnp.concatenate([enc_art, params["truncate"].reshape(1, D),
                                params["stop"].reshape(1, D)], axis=0)
    attn_feat = attn_mem @ params["attn_wm"]
    hop_feat = attn_mem @ params["hop_wm"]
    lstm_in, h, c = params["init_i"], params["init_h"], params["init_c"]
    outputs, flag, center = [], False, -1
    for t in range(MAX_STEPS):
        h, c = _lstm_cell_ref(lstm_in, h, c, params["wih_t"], params["whh_t"], params["b"])
        query = h
        for _ in range(N_HOP):
            query = _attn_context_ref(hop_feat, hop_feat, query,
                                      params["hop_wq"], params["hop_v"])
        score = np.asarray(_attn_score_ref(attn_feat, query,
                                           params["attn_wq"], params["attn_v"])
                           ).reshape(-1).copy()
        for o in outputs:
            if o != truncate:
                score[o] = -1e18
        if flag:
            for p_ in range(truncate):
                if abs(sent_labels[p_] - center) > 1000:
                    score[p_] = -1e18
        if t > 100:
            score[truncate] = -1e18
            if t > 110:
                score[stop] = 1e8
        out = int(np.argmax(score))
        outputs.append(out)
        if out == truncate:
            flag = False
        elif (not flag) and out != stop:
            center = int(sent_labels[out])
            flag = True
        if out == stop:
            break
        lstm_in = attn_mem[out][None, :]
    return outputs


def ref_scorer(n_step, enc_art, params):
    attn_feat = enc_art @ params["attn_wm"]
    hop_feat = enc_art @ params["hop_wm"]
    lstm_in, h, c = params["init_i"], params["init_h"], params["init_c"]
    scores = []
    for _ in range(n_step):
        h, c = _lstm_cell_ref(lstm_in, h, c, params["wih_t"], params["whh_t"], params["b"])
        query = h
        for _ in range(N_HOP):
            query = _attn_context_ref(hop_feat, hop_feat, query,
                                      params["hop_wq"], params["hop_v"])
        output = _attn_context_ref(attn_feat, enc_art, query,
                                   params["attn_wq"], params["attn_v"])
        scores.append(jnp.dot(output, params["w_score"]) + params["b_score"])
        lstm_in = output
    return jnp.concatenate(scores, axis=0).reshape(n_step)


# ----------------------------------------------------------------------------
if __name__ == "__main__":
    key = jax.random.PRNGKey(0)
    pkey, xkey = jax.random.split(key)
    params = make_params(pkey)

    N = 6  # number of article sentences
    enc_art = jax.random.normal(xkey, (N, D), jnp.float32)   # pre-encoded article
    sent_labels = [3, 7, 12, 1500, 1503, 1510]               # sentence position labels

    # one fused kernel call: greedy actor decode + critic rollout
    seq, extracts, scores = actor_critic_forward(enc_art, sent_labels, params)

    # validate actor (eval/greedy path of PtrExtractorRL.forward)
    seq_ref = ref_actor_decode(enc_art, sent_labels, params)
    assert seq == seq_ref, (seq, seq_ref)
    assert len(extracts) >= 1

    # validate critic (PtrScorer) with n_step = total number of decode steps
    n_abs = len(seq)
    scores_ref = np.asarray(ref_scorer(n_abs, enc_art, params))
    assert scores.shape == (n_abs,)
    assert np.allclose(scores, scores_ref, rtol=1e-2, atol=5e-3)

    print("KERNEL_OK")
</pallas_src>

<mosaic_0001>
module attributes {stable_mosaic.version = 11 : i64} {
  func.func @_actor_critic_kernel(%arg0: memref<1xi32, #tpu.memory_space<smem>>, %arg1: memref<64xi32, #tpu.memory_space<smem>>, %arg2: memref<1x64xi32, #tpu.memory_space<vmem>>, %arg3: memref<64x32xf32, #tpu.memory_space<vmem>>, %arg4: memref<32x64xf32, #tpu.memory_space<vmem>>, %arg5: memref<1x32xf32, #tpu.memory_space<vmem>>, %arg6: memref<1x32xf32, #tpu.memory_space<vmem>>, %arg7: memref<32x1xf32, #tpu.memory_space<vmem>>, %arg8: memref<32x1xf32, #tpu.memory_space<vmem>>, %arg9: memref<32x32xf32, #tpu.memory_space<vmem>>, %arg10: memref<64x32xf32, #tpu.memory_space<vmem>>, %arg11: memref<32x128xf32, #tpu.memory_space<vmem>>, %arg12: memref<32x128xf32, #tpu.memory_space<vmem>>, %arg13: memref<1x128xf32, #tpu.memory_space<vmem>>, %arg14: memref<32x32xf32, #tpu.memory_space<vmem>>, %arg15: memref<1x32xf32, #tpu.memory_space<vmem>>, %arg16: memref<32x32xf32, #tpu.memory_space<vmem>>, %arg17: memref<1x32xf32, #tpu.memory_space<vmem>>, %arg18: memref<32x1xf32, #tpu.memory_space<vmem>>, %arg19: memref<1x1xf32, #tpu.memory_space<vmem>>, %arg20: memref<1x32xf32, #tpu.memory_space<vmem>>, %arg21: memref<1x32xf32, #tpu.memory_space<vmem>>, %arg22: memref<1x32xf32, #tpu.memory_space<vmem>>, %arg23: memref<128xi32, #tpu.memory_space<smem>>, %arg24: memref<1xi32, #tpu.memory_space<smem>>, %arg25: memref<128xf32, #tpu.memory_space<smem>>, %arg26: memref<64x32xf32, #tpu.memory_space<vmem>>, %arg27: memref<64x32xf32, #tpu.memory_space<vmem>>, %arg28: memref<32x64xf32, #tpu.memory_space<vmem>>, %arg29: memref<32x64xf32, #tpu.memory_space<vmem>>, %arg30: memref<1x32xf32, #tpu.memory_space<vmem>>, %arg31: memref<1x32xf32, #tpu.memory_space<vmem>>, %arg32: memref<1x32xf32, #tpu.memory_space<vmem>>, %arg33: memref<1x64xf32, #tpu.memory_space<vmem>>, %arg34: memref<1x1xi32, #tpu.memory_space<vmem>>, %arg35: memref<1x1xf32, #tpu.memory_space<vmem>>) attributes {dimension_semantics = [], scalar_prefetch = 0 : i64, scratch_operands = 10 : i64, tpu.core_type = #tpu.core_type<tc>} {
    %c0 = arith.constant 0 : index
    %0 = memref.load %arg0[%c0] : memref<1xi32, #tpu.memory_space<smem>>
    %c1_i32 = arith.constant 1 : i32
    %1 = arith.addi %0, %c1_i32 : i32
    %2 = tpu.iota {dimensions = array<i32: 1>} : vector<1x64xi32>
    %3 = arith.sitofp %2 : vector<1x64xi32> to vector<1x64xf32>
    %c2_i32 = arith.constant 2 : i32
    %4 = arith.addi %0, %c2_i32 : i32
    %5 = vector.broadcast %4 : i32 to vector<1x64xi32>
    %6 = arith.cmpi slt, %2, %5 : vector<1x64xi32>
    %7 = vector.broadcast %0 : i32 to vector<1x64xi32>
    %8 = arith.cmpi slt, %2, %7 : vector<1x64xi32>
    %9 = vector.broadcast %0 : i32 to vector<1x64xi32>
    %10 = arith.cmpi eq, %2, %9 : vector<1x64xi32>
    %11 = vector.broadcast %1 : i32 to vector<1x64xi32>
    %12 = arith.cmpi eq, %2, %11 : vector<1x64xi32>
    %13 = tpu.iota {dimensions = array<i32: 0>} : vector<64x1xi32>
    %14 = vector.broadcast %0 : i32 to vector<64x1xi32>
    %15 = arith.cmpi eq, %13, %14 : vector<64x1xi32>
    %c0_0 = arith.constant 0 : index
    %c0_1 = arith.constant 0 : index
    %16 = vector.load %arg5[%c0_0, %c0_1] : memref<1x32xf32, #tpu.memory_space<vmem>>, vector<1x32xf32>
    %17 = vector.broadcast %1 : i32 to vector<64x1xi32>
    %18 = arith.cmpi eq, %13, %17 : vector<64x1xi32>
    %c0_2 = arith.constant 0 : index
    %c0_3 = arith.constant 0 : index
    %19 = vector.load %arg6[%c0_2, %c0_3] : memref<1x32xf32, #tpu.memory_space<vmem>>, vector<1x32xf32>
    %c0_4 = arith.constant 0 : index
    %c0_5 = arith.constant 0 : index
    %20 = vector.load %arg3[%c0_4, %c0_5] : memref<64x32xf32, #tpu.memory_space<vmem>>, vector<64x32xf32>
    %21 = vector.shape_cast %18 : vector<64x1xi1> to vector<64x1xi1>
    %22 = vector.broadcast %21 : vector<64x1xi1> to vector<64x32xi1>
    %23 = vector.shape_cast %19 : vector<1x32xf32> to vector<1x32xf32>
    %24 = vector.broadcast %23 : vector<1x32xf32> to vector<64x32xf32>
    %25 = arith.select %22, %24, %20 : vector<64x32xi1>, vector<64x32xf32>
    %26 = vector.shape_cast %15 : vector<64x1xi1> to vector<64x1xi1>
    %27 = vector.broadcast %26 : vector<64x1xi1> to vector<64x32xi1>
    %28 = vector.shape_cast %16 : vector<1x32xf32> to vector<1x32xf32>
    %29 = vector.broadcast %28 : vector<1x32xf32> to vector<64x32xf32>
    %30 = arith.select %27, %29, %25 : vector<64x32xi1>, vector<64x32xf32>
    %c0_6 = arith.constant 0 : index
    %c0_7 = arith.constant 0 : index
    %31 = vector.load %arg26[%c0_6, %c0_7] : memref<64x32xf32, #tpu.memory_space<vmem>>, vector<64x32xf32>
    tpu.vector_store %arg26[%c0_6, %c0_7], %30 {strides = array<i32>} : memref<64x32xf32, #tpu.memory_space<vmem>>, vector<64x32xf32>,
    %c0_8 = arith.constant 0 : index
    %c0_9 = arith.constant 0 : index
    %32 = vector.load %arg9[%c0_8, %c0_9] : memref<32x32xf32, #tpu.memory_space<vmem>>, vector<32x32xf32>
    %cst = arith.constant dense<0.000000e+00> : vector<64x32xf32>
    %33 = tpu.matmul %30, %32, %cst {dimension_numbers = #tpu.dot_dimension_numbers<[1], [0], [0], [1], [0, 0, 1, 1], [], []>} : vector<64x32xf32>, vector<32x32xf32>, vector<64x32xf32> -> vector<64x32xf32>
    %c0_10 = arith.constant 0 : index
    %c0_11 = arith.constant 0 : index
    %34 = vector.load %arg27[%c0_10, %c0_11] : memref<64x32xf32, #tpu.memory_space<vmem>>, vector<64x32xf32>
    tpu.vector_store %arg27[%c0_10, %c0_11], %33 {strides = array<i32>} : memref<64x32xf32, #tpu.memory_space<vmem>>, vector<64x32xf32>,
    %c0_12 = arith.constant 0 : index
    %c0_13 = arith.constant 0 : index
    %35 = vector.load %arg7[%c0_12, %c0_13] : memref<32x1xf32, #tpu.memory_space<vmem>>, vector<32x1xf32>
    %c0_14 = arith.constant 0 : index
    %c0_15 = arith.constant 0 : index
    %36 = vector.load %arg8[%c0_14, %c0_15] : memref<32x1xf32, #tpu.memory_space<vmem>>, vector<32x1xf32>
    %c0_16 = arith.constant 0 : index
    %c0_17 = arith.constant 0 : index
    %37 = vector.load %arg4[%c0_16, %c0_17] : memref<32x64xf32, #tpu.memory_space<vmem>>, vector<32x64xf32>
    %38 = vector.shape_cast %12 : vector<1x64xi1> to vector<1x64xi1>
    %39 = vector.broadcast %38 : vector<1x64xi1> to vector<32x64xi1>
    %40 = vector.shape_cast %36 : vector<32x1xf32> to vector<32x1xf32>
    %41 = vector.broadcast %40 : vector<32x1xf32> to vector<32x64xf32>
    %42 = arith.select %39, %41, %37 : vector<32x64xi1>, vector<32x64xf32>
    %43 = vector.shape_cast %10 : vector<1x64xi1> to vector<1x64xi1>
    %44 = vector.broadcast %43 : vector<1x64xi1> to vector<32x64xi1>
    %45 = vector.shape_cast %35 : vector<32x1xf32> to vector<32x1xf32>
    %46 = vector.broadcast %45 : vector<32x1xf32> to vector<32x64xf32>
    %47 = arith.select %44, %46, %42 : vector<32x64xi1>, vector<32x64xf32>
    %c0_18 = arith.constant 0 : index
    %c0_19 = arith.constant 0 : index
    %48 = vector.load %arg10[%c0_18, %c0_19] : memref<64x32xf32, #tpu.memory_space<vmem>>, vector<64x32xf32>
    %cst_20 = arith.constant dense<0.000000e+00> : vector<64x64xf32>
    %49 = tpu.matmul %48, %47, %cst_20 {dimension_numbers = #tpu.dot_dimension_numbers<[1], [0], [0], [1], [0, 0, 1, 1], [], []>} : vector<64x32xf32>, vector<32x64xf32>, vector<64x64xf32> -> vector<64x64xf32>
    %50 = vector.extract_strided_slice %49 {offsets = [0, 0], sizes = [32, 64], strides = [1, 1]} : vector<64x64xf32> to vector<32x64xf32>
    %c0_21 = arith.constant 0 : index
    %c0_22 = arith.constant 0 : index
    %51 = vector.load %arg28[%c0_21, %c0_22] : memref<32x64xf32, #tpu.memory_space<vmem>>, vector<32x64xf32>
    tpu.vector_store %arg28[%c0_21, %c0_22], %50 {strides = array<i32>} : memref<32x64xf32, #tpu.memory_space<vmem>>, vector<32x64xf32>,
    %52 = vector.extract_strided_slice %49 {offsets = [32, 0], sizes = [32, 64], strides = [1, 1]} : vector<64x64xf32> to vector<32x64xf32>
    %c0_23 = arith.constant 0 : index
    %c0_24 = arith.constant 0 : index
    %53 = vector.load %arg29[%c0_23, %c0_24] : memref<32x64xf32, #tpu.memory_space<vmem>>, vector<32x64xf32>
    tpu.vector_store %arg29[%c0_23, %c0_24], %52 {strides = array<i32>} : memref<32x64xf32, #tpu.memory_space<vmem>>, vector<32x64xf32>,
    %c0_25 = arith.constant 0 : index
    %c0_26 = arith.constant 0 : index
    %54 = vector.load %arg11[%c0_25, %c0_26] : memref<32x128xf32, #tpu.memory_space<vmem>>, vector<32x128xf32>
    %c0_27 = arith.constant 0 : index
    %c0_28 = arith.constant 0 : index
    %55 = vector.load %arg12[%c0_27, %c0_28] : memref<32x128xf32, #tpu.memory_space<vmem>>, vector<32x128xf32>
    %c0_29 = arith.constant 0 : index
    %c0_30 = arith.constant 0 : index
    %56 = vector.load %arg13[%c0_29, %c0_30] : memref<1x128xf32, #tpu.memory_space<vmem>>, vector<1x128xf32>
    %c0_31 = arith.constant 0 : index
    %c0_32 = arith.constant 0 : index
    %57 = vector.load %arg14[%c0_31, %c0_32] : memref<32x32xf32, #tpu.memory_space<vmem>>, vector<32x32xf32>
    %c0_33 = arith.constant 0 : index
    %c0_34 = arith.constant 0 : index
    %58 = vector.load %arg16[%c0_33, %c0_34] : memref<32x32xf32, #tpu.memory_space<vmem>>, vector<32x32xf32>
    %c0_35 = arith.constant 0 : index
    %c0_36 = arith.constant 0 : index
    %59 = vector.load %arg15[%c0_35, %c0_36] : memref<1x32xf32, #tpu.memory_space<vmem>>, vector<1x32xf32>
    %c0_37 = arith.constant 0 : index
    %c0_38 = arith.constant 0 : index
    %60 = vector.load %arg17[%c0_37, %c0_38] : memref<1x32xf32, #tpu.memory_space<vmem>>, vector<1x32xf32>
    %c0_39 = arith.constant 0 : index
    %c0_40 = arith.constant 0 : index
    %61 = vector.load %arg18[%c0_39, %c0_40] : memref<32x1xf32, #tpu.memory_space<vmem>>, vector<32x1xf32>
    %c0_41 = arith.constant 0 : index
    %c0_42 = arith.constant 0 : index
    %62 = vector.load %arg19[%c0_41, %c0_42] : memref<1x1xf32, #tpu.memory_space<vmem>>, vector<1x1xf32>
    %c0_43 = arith.constant 0 : index
    %c0_44 = arith.constant 0 : index
    %63 = vector.load %arg2[%c0_43, %c0_44] : memref<1x64xi32, #tpu.memory_space<vmem>>, vector<1x64xi32>
    %c0_45 = arith.constant 0 : index
    %c0_46 = arith.constant 0 : index
    %64 = vector.load %arg21[%c0_45, %c0_46] : memref<1x32xf32, #tpu.memory_space<vmem>>, vector<1x32xf32>
    %c0_47 = arith.constant 0 : index
    %c0_48 = arith.constant 0 : index
    %65 = vector.load %arg30[%c0_47, %c0_48] : memref<1x32xf32, #tpu.memory_space<vmem>>, vector<1x32xf32>
    tpu.vector_store %arg30[%c0_47, %c0_48], %64 {strides = array<i32>} : memref<1x32xf32, #tpu.memory_space<vmem>>, vector<1x32xf32>,
    %c0_49 = arith.constant 0 : index
    %c0_50 = arith.constant 0 : index
    %66 = vector.load %arg22[%c0_49, %c0_50] : memref<1x32xf32, #tpu.memory_space<vmem>>, vector<1x32xf32>
    %c0_51 = arith.constant 0 : index
    %c0_52 = arith.constant 0 : index
    %67 = vector.load %arg31[%c0_51, %c0_52] : memref<1x32xf32, #tpu.memory_space<vmem>>, vector<1x32xf32>
    tpu.vector_store %arg31[%c0_51, %c0_52], %66 {strides = array<i32>} : memref<1x32xf32, #tpu.memory_space<vmem>>, vector<1x32xf32>,
    %c0_53 = arith.constant 0 : index
    %c0_54 = arith.constant 0 : index
    %68 = vector.load %arg20[%c0_53, %c0_54] : memref<1x32xf32, #tpu.memory_space<vmem>>, vector<1x32xf32>
    %c0_55 = arith.constant 0 : index
    %c0_56 = arith.constant 0 : index
    %69 = vector.load %arg32[%c0_55, %c0_56] : memref<1x32xf32, #tpu.memory_space<vmem>>, vector<1x32xf32>
    tpu.vector_store %arg32[%c0_55, %c0_56], %68 {strides = array<i32>} : memref<1x32xf32, #tpu.memory_space<vmem>>, vector<1x32xf32>,
    %cst_57 = arith.constant 0.000000e+00 : f32
    %70 = vector.broadcast %cst_57 : f32 to vector<1x64xf32>
    %c0_58 = arith.constant 0 : index
    %c0_59 = arith.constant 0 : index
    %71 = vector.load %arg33[%c0_58, %c0_59] : memref<1x64xf32, #tpu.memory_space<vmem>>, vector<1x64xf32>
    tpu.vector_store %arg33[%c0_58, %c0_59], %70 {strides = array<i32>} : memref<1x64xf32, #tpu.memory_space<vmem>>, vector<1x64xf32>,
    %c0_i32 = arith.constant 0 : i32
    %c0_i32_60 = arith.constant 0 : i32
    %c-1_i32 = arith.constant -1 : i32
    %c0_i32_61 = arith.constant 0 : i32
    %72:4 = scf.while (%arg36 = %c0_i32, %arg37 = %c0_i32_60, %arg38 = %c-1_i32, %arg39 = %c0_i32_61) : (i32, i32, i32, i32) -> (i32, i32, i32, i32) {
      %c128_i32 = arith.constant 128 : i32
      %86 = arith.cmpi slt, %arg36, %c128_i32 : i32
      %c0_i32_83 = arith.constant 0 : i32
      %87 = arith.cmpi eq, %arg39, %c0_i32_83 : i32
      %88 = arith.andi %86, %87 : i1
      scf.condition(%88) %arg36, %arg37, %arg38, %arg39 : i32, i32, i32, i32
    } do {
    ^bb0(%arg36: i32, %arg37: i32, %arg38: i32, %arg39: i32):
      %c0_83 = arith.constant 0 : index
      %c0_84 = arith.constant 0 : index
      %86 = vector.load %arg32[%c0_83, %c0_84] : memref<1x32xf32, #tpu.memory_space<vmem>>, vector<1x32xf32>
      %c0_85 = arith.constant 0 : index
      %c0_86 = arith.constant 0 : index
      %87 = vector.load %arg30[%c0_85, %c0_86] : memref<1x32xf32, #tpu.memory_space<vmem>>, vector<1x32xf32>
      %c0_87 = arith.constant 0 : index
      %c0_88 = arith.constant 0 : index
      %88 = vector.load %arg31[%c0_87, %c0_88] : memref<1x32xf32, #tpu.memory_space<vmem>>, vector<1x32xf32>
      %cst_89 = arith.constant dense<0.000000e+00> : vector<1x128xf32>
      %89 = tpu.matmul %86, %54, %cst_89 {dimension_numbers = #tpu.dot_dimension_numbers<[1], [0], [0], [1], [0, 0, 1, 1], [], []>} : vector<1x32xf32>, vector<32x128xf32>, vector<1x128xf32> -> vector<1x128xf32>
      %cst_90 = arith.constant dense<0.000000e+00> : vector<1x128xf32>
      %90 = tpu.matmul %87, %55, %cst_90 {dimension_numbers = #tpu.dot_dimension_numbers<[1], [0], [0], [1], [0, 0, 1, 1], [], []>} : vector<1x32xf32>, vector<32x128xf32>, vector<1x128xf32> -> vector<1x128xf32>
      %91 = arith.addf %89, %90 : vector<1x128xf32>
      %92 = arith.addf %91, %56 : vector<1x128xf32>
      %93 = vector.extract_strided_slice %92 {offsets = [0, 0], sizes = [1, 32], strides = [1, 1]} : vector<1x128xf32> to vector<1x32xf32>
      %94 = arith.negf %93 : vector<1x32xf32>
      %95 = math.exp %94 : vector<1x32xf32>
      %cst_91 = arith.constant 1.000000e+00 : f32
      %96 = vector.broadcast %cst_91 : f32 to vector<1x32xf32>
      %97 = arith.addf %96, %95 : vector<1x32xf32>
      %98 = arith.divf %96, %97 : vector<1x32xf32>
      %99 = vector.extract_strided_slice %92 {offsets = [0, 32], sizes = [1, 32], strides = [1, 1]} : vector<1x128xf32> to vector<1x32xf32>
      %100 = arith.negf %99 : vector<1x32xf32>
      %101 = math.exp %100 : vector<1x32xf32>
      %cst_92 = arith.constant 1.000000e+00 : f32
      %102 = vector.broadcast %cst_92 : f32 to vector<1x32xf32>
      %103 = arith.addf %102, %101 : vector<1x32xf32>
      %104 = arith.divf %102, %103 : vector<1x32xf32>
      %105 = vector.extract_strided_slice %92 {offsets = [0, 64], sizes = [1, 32], strides = [1, 1]} : vector<1x128xf32> to vector<1x32xf32>
      %106 = math.tanh %105 : vector<1x32xf32>
      %107 = vector.extract_strided_slice %92 {offsets = [0, 96], sizes = [1, 32], strides = [1, 1]} : vector<1x128xf32> to vector<1x32xf32>
      %108 = arith.negf %107 : vector<1x32xf32>
      %109 = math.exp %108 : vector<1x32xf32>
      %cst_93 = arith.constant 1.000000e+00 : f32
      %110 = vector.broadcast %cst_93 : f32 to vector<1x32xf32>
      %111 = arith.addf %110, %109 : vector<1x32xf32>
      %112 = arith.divf %110, %111 : vector<1x32xf32>
      %113 = arith.mulf %104, %88 : vector<1x32xf32>
      %114 = arith.mulf %98, %106 : vector<1x32xf32>
      %115 = arith.addf %113, %114 : vector<1x32xf32>
      %116 = math.tanh %115 : vector<1x32xf32>
      %117 = arith.mulf %112, %116 : vector<1x32xf32>
      %c0_94 = arith.constant 0 : index
      %c0_95 = arith.constant 0 : index
      %118 = vector.load %arg30[%c0_94, %c0_95] : memref<1x32xf32, #tpu.memory_space<vmem>>, vector<1x32xf32>
      tpu.vector_store %arg30[%c0_94, %c0_95], %117 {strides = array<i32>} : memref<1x32xf32, #tpu.memory_space<vmem>>, vector<1x32xf32>,
      %c0_96 = arith.constant 0 : index
      %c0_97 = arith.constant 0 : index
      %119 = vector.load %arg31[%c0_96, %c0_97] : memref<1x32xf32, #tpu.memory_space<vmem>>, vector<1x32xf32>
      tpu.vector_store %arg31[%c0_96, %c0_97], %115 {strides = array<i32>} : memref<1x32xf32, #tpu.memory_space<vmem>>, vector<1x32xf32>,
      %c0_98 = arith.constant 0 : index
      %c0_99 = arith.constant 0 : index
      %120 = vector.load %arg29[%c0_98, %c0_99] : memref<32x64xf32, #tpu.memory_space<vmem>>, vector<32x64xf32>
      %c0_100 = arith.constant 0 : index
      %c0_101 = arith.constant 0 : index
      %121 = vector.load %arg27[%c0_100, %c0_101] : memref<64x32xf32, #tpu.memory_space<vmem>>, vector<64x32xf32>
      %cst_102 = arith.constant dense<0.000000e+00> : vector<32x1xf32>
      %122 = tpu.matmul %57, %117, %cst_102 {dimension_numbers = #tpu.dot_dimension_numbers<[1], [1], [0], [0], [0, 0, 1, 0], [], []>} : vector<32x32xf32>, vector<1x32xf32>, vector<32x1xf32> -> vector<32x1xf32>
      %123 = vector.broadcast %122 : vector<32x1xf32> to vector<32x64xf32>
      %124 = arith.addf %120, %123 : vector<32x64xf32>
      %125 = math.tanh %124 : vector<32x64xf32>
      %cst_103 = arith.constant dense<0.000000e+00> : vector<1x64xf32>
      %126 = tpu.matmul %59, %125, %cst_103 {dimension_numbers = #tpu.dot_dimension_numbers<[1], [0], [0], [1], [0, 0, 1, 1], [], []>} : vector<1x32xf32>, vector<32x64xf32>, vector<1x64xf32> -> vector<1x64xf32>
      %cst_104 = arith.constant -1.000000e+30 : f32
      %127 = vector.broadcast %cst_104 : f32 to vector<1x64xf32>
      %128 = arith.select %6, %126, %127 : vector<1x64xi1>, vector<1x64xf32>
      %cst_105 = arith.constant dense<0xFF800000> : vector<1xf32>
      %129 = vector.multi_reduction <maximumf>, %128, %cst_105 [1] : vector<1x64xf32> to vector<1xf32>
      %130 = vector.shape_cast %129 : vector<1xf32> to vector<1x1xf32>
      %131 = vector.broadcast %130 : vector<1x1xf32> to vector<1x64xf32>
      %132 = arith.subf %128, %131 : vector<1x64xf32>
      %133 = math.exp %132 : vector<1x64xf32>
      %cst_106 = arith.constant 0.000000e+00 : f32
      %134 = vector.broadcast %cst_106 : f32 to vector<1x64xf32>
      %135 = arith.select %6, %133, %134 : vector<1x64xi1>, vector<1x64xf32>
      %cst_107 = arith.constant dense<0.000000e+00> : vector<1xf32>
      %136 = vector.multi_reduction <add>, %135, %cst_107 [1] : vector<1x64xf32> to vector<1xf32>
      %137 = vector.shape_cast %136 : vector<1xf32> to vector<1x1xf32>
      %138 = tpu.reciprocal %137 : vector<1x1xf32> -> vector<1x1xf32>
      %139 = vector.broadcast %138 : vector<1x1xf32> to vector<1x64xf32>
      %140 = arith.mulf %135, %139 : vector<1x64xf32>
      %cst_108 = arith.constant dense<0.000000e+00> : vector<1x32xf32>
      %141 = tpu.matmul %140, %121, %cst_108 {dimension_numbers = #tpu.dot_dimension_numbers<[1], [0], [0], [1], [0, 0, 1, 1], [], []>} : vector<1x64xf32>, vector<64x32xf32>, vector<1x32xf32> -> vector<1x32xf32>
      %c0_109 = arith.constant 0 : index
      %c0_110 = arith.constant 0 : index
      %142 = vector.load %arg28[%c0_109, %c0_110] : memref<32x64xf32, #tpu.memory_space<vmem>>, vector<32x64xf32>
      %cst_111 = arith.constant dense<0.000000e+00> : vector<32x1xf32>
      %143 = tpu.matmul %58, %141, %cst_111 {dimension_numbers = #tpu.dot_dimension_numbers<[1], [1], [0], [0], [0, 0, 1, 0], [], []>} : vector<32x32xf32>, vector<1x32xf32>, vector<32x1xf32> -> vector<32x1xf32>
      %144 = vector.broadcast %143 : vector<32x1xf32> to vector<32x64xf32>
      %145 = arith.addf %142, %144 : vector<32x64xf32>
      %146 = math.tanh %145 : vector<32x64xf32>
      %cst_112 = arith.constant dense<0.000000e+00> : vector<1x64xf32>
      %147 = tpu.matmul %60, %146, %cst_112 {dimension_numbers = #tpu.dot_dimension_numbers<[1], [0], [0], [1], [0, 0, 1, 1], [], []>} : vector<1x32xf32>, vector<32x64xf32>, vector<1x64xf32> -> vector<1x64xf32>
      %c0_113 = arith.constant 0 : index
      %c0_114 = arith.constant 0 : index
      %148 = vector.load %arg33[%c0_113, %c0_114] : memref<1x64xf32, #tpu.memory_space<vmem>>, vector<1x64xf32>
      %cst_115 = arith.constant 5.000000e-01 : f32
      %149 = vector.broadcast %cst_115 : f32 to vector<1x64xf32>
      %150 = arith.cmpf ogt, %148, %149 : vector<1x64xf32>
      %cst_116 = arith.constant -9.99999984E+17 : f32
      %151 = vector.broadcast %cst_116 : f32 to vector<1x64xf32>
      %152 = arith.select %150, %151, %147 : vector<1x64xi1>, vector<1x64xf32>
      %153 = vector.broadcast %arg38 : i32 to vector<1x64xi32>
      %154 = arith.subi %63, %153 : vector<1x64xi32>
      %155 = math.absi %154 : vector<1x64xi32>
      %c1000_i32 = arith.constant 1000 : i32
      %156 = vector.broadcast %c1000_i32 : i32 to vector<1x64xi32>
      %157 = arith.cmpi sgt, %155, %156 : vector<1x64xi32>
      %158 = arith.andi %157, %8 : vector<1x64xi1>
      %c1_i32_117 = arith.constant 1 : i32
      %159 = arith.cmpi eq, %arg37, %c1_i32_117 : i32
      %160 = vector.broadcast %159 : i1 to vector<1x64xi1>
      %161 = arith.andi %160, %158 : vector<1x64xi1>
      %cst_118 = arith.constant -9.99999984E+17 : f32
      %162 = vector.broadcast %cst_118 : f32 to vector<1x64xf32>
      %163 = arith.select %161, %162, %152 : vector<1x64xi1>, vector<1x64xf32>
      %c100_i32 = arith.constant 100 : i32
      %164 = arith.cmpi sgt, %arg36, %c100_i32 : i32
      %165 = vector.broadcast %164 : i1 to vector<1x64xi1>
      %166 = arith.andi %165, %10 : vector<1x64xi1>
      %cst_119 = arith.constant -9.99999984E+17 : f32
      %167 = vector.broadcast %cst_119 : f32 to vector<1x64xf32>
      %168 = arith.select %166, %167, %163 : vector<1x64xi1>, vector<1x64xf32>
      %c110_i32 = arith.constant 110 : i32
      %169 = arith.cmpi sgt, %arg36, %c110_i32 : i32
      %170 = vector.broadcast %169 : i1 to vector<1x64xi1>
      %171 = arith.andi %170, %12 : vector<1x64xi1>
      %cst_120 = arith.constant 1.000000e+08 : f32
      %172 = vector.broadcast %cst_120 : f32 to vector<1x64xf32>
      %173 = arith.select %171, %172, %168 : vector<1x64xi1>, vector<1x64xf32>
      %cst_121 = arith.constant -1.000000e+30 : f32
      %174 = vector.broadcast %cst_121 : f32 to vector<1x64xf32>
      %175 = arith.select %6, %173, %174 : vector<1x64xi1>, vector<1x64xf32>
      %cst_122 = arith.constant dense<0xFF800000> : vector<1xf32>
      %176 = vector.multi_reduction <maximumf>, %175, %cst_122 [1] : vector<1x64xf32> to vector<1xf32>
      %177 = vector.shape_cast %176 : vector<1xf32> to vector<1x1xf32>
      %178 = vector.broadcast %177 : vector<1x1xf32> to vector<1x64xf32>
      %179 = arith.cmpf oge, %175, %178 : vector<1x64xf32>
      %cst_123 = arith.constant 1.000000e+09 : f32
      %180 = vector.broadcast %cst_123 : f32 to vector<1x64xf32>
      %181 = arith.select %179, %3, %180 : vector<1x64xi1>, vector<1x64xf32>
      %cst_124 = arith.constant dense<0x7F800000> : vector<1xf32>
      %182 = vector.multi_reduction <minimumf>, %181, %cst_124 [1] : vector<1x64xf32> to vector<1xf32>
      %183 = vector.shape_cast %182 : vector<1xf32> to vector<1x1xf32>
      %184 = arith.fptosi %183 : vector<1x1xf32> to vector<1x1xi32>
      %c0_125 = arith.constant 0 : index
      %c0_126 = arith.constant 0 : index
      %185 = vector.load %arg34[%c0_125, %c0_126] : memref<1x1xi32, #tpu.memory_space<vmem>>, vector<1x1xi32>
      tpu.vector_store %arg34[%c0_125, %c0_126], %184 {strides = array<i32>} : memref<1x1xi32, #tpu.memory_space<vmem>>, vector<1x1xi32>,
      %c0_127 = arith.constant 0 : index
      %c0_128 = arith.constant 0 : index
      %186 = vector.load %arg34[%c0_127, %c0_128] : memref<1x1xi32, #tpu.memory_space<vmem>>, vector<1x1xi32>
      %187 = vector.extract %186[0, 0] : i32 from vector<1x1xi32>
      %188 = arith.index_cast %arg36 : i32 to index
      %189 = memref.load %arg23[%188] : memref<128xi32, #tpu.memory_space<smem>>
      memref.store %187, %arg23[%188] : memref<128xi32, #tpu.memory_space<smem>>
      %190 = vector.broadcast %187 : i32 to vector<1x64xi32>
      %191 = arith.cmpi eq, %2, %190 : vector<1x64xi32>
      %192 = arith.cmpi ne, %187, %0 : i32
      %193 = vector.broadcast %192 : i1 to vector<1x64xi1>
      %194 = arith.andi %191, %193 : vector<1x64xi1>
      %c0_129 = arith.constant 0 : index
      %c0_130 = arith.constant 0 : index
      %195 = vector.load %arg33[%c0_129, %c0_130] : memref<1x64xf32, #tpu.memory_space<vmem>>, vector<1x64xf32>
      %cst_131 = arith.constant 1.000000e+00 : f32
      %196 = vector.broadcast %cst_131 : f32 to vector<1x64xf32>
      %197 = arith.select %194, %196, %195 : vector<1x64xi1>, vector<1x64xf32>
      %c0_132 = arith.constant 0 : index
      %c0_133 = arith.constant 0 : index
      %198 = vector.load %arg33[%c0_132, %c0_133] : memref<1x64xf32, #tpu.memory_space<vmem>>, vector<1x64xf32>
      tpu.vector_store %arg33[%c0_132, %c0_133], %197 {strides = array<i32>} : memref<1x64xf32, #tpu.memory_space<vmem>>, vector<1x64xf32>,
      %199 = arith.index_cast %187 : i32 to index
      %c0_134 = arith.constant 0 : index
      %200 = vector.load %arg26[%199, %c0_134] : memref<64x32xf32, #tpu.memory_space<vmem>>, vector<1x32xf32>
      %c0_135 = arith.constant 0 : index
      %c0_136 = arith.constant 0 : index
      %201 = vector.load %arg32[%c0_135, %c0_136] : memref<1x32xf32, #tpu.memory_space<vmem>>, vector<1x32xf32>
      tpu.vector_store %arg32[%c0_135, %c0_136], %200 {strides = array<i32>} : memref<1x32xf32, #tpu.memory_space<vmem>>, vector<1x32xf32>,
      %202 = arith.cmpi eq, %187, %0 : i32
      %203 = arith.cmpi eq, %187, %1 : i32
      %true = arith.constant true
      %204 = arith.xori %202, %true : i1
      %c0_i32_137 = arith.constant 0 : i32
      %205 = arith.cmpi eq, %arg37, %c0_i32_137 : i32
      %true_138 = arith.constant true
      %206 = arith.xori %203, %true_138 : i1
      %207 = arith.andi %205, %206 : i1
      %208 = arith.andi %204, %207 : i1
      %c1_i32_139 = arith.constant 1 : i32
      %209 = arith.select %208, %c1_i32_139, %arg37 : i32
      %c0_i32_140 = arith.constant 0 : i32
      %210 = arith.select %202, %c0_i32_140, %209 : i32
      %211 = arith.index_cast %187 : i32 to index
      %212 = memref.load %arg1[%211] : memref<64xi32, #tpu.memory_space<smem>>
      %213 = arith.select %208, %212, %arg38 : i32
      %c1_i32_141 = arith.constant 1 : i32
      %214 = arith.select %203, %c1_i32_141, %arg39 : i32
      %c1_i32_142 = arith.constant 1 : i32
      %215 = arith.addi %arg36, %c1_i32_142 : i32
      scf.yield %215, %210, %213, %214 : i32, i32, i32, i32
    }
    %c0_62 = arith.constant 0 : index
    %73 = memref.load %arg24[%c0_62] : memref<1xi32, #tpu.memory_space<smem>>
    memref.store %72#0, %arg24[%c0_62] : memref<1xi32, #tpu.memory_space<smem>>
    %c0_63 = arith.constant 0 : index
    %c0_64 = arith.constant 0 : index
    %74 = vector.load %arg21[%c0_63, %c0_64] : memref<1x32xf32, #tpu.memory_space<vmem>>, vector<1x32xf32>
    %c0_65 = arith.constant 0 : index
    %c0_66 = arith.constant 0 : index
    %75 = vector.load %arg30[%c0_65, %c0_66] : memref<1x32xf32, #tpu.memory_space<vmem>>, vector<1x32xf32>
    tpu.vector_store %arg30[%c0_65, %c0_66], %74 {strides = array<i32>} : memref<1x32xf32, #tpu.memory_space<vmem>>, vector<1x32xf32>,
    %c0_67 = arith.constant 0 : index
    %c0_68 = arith.constant 0 : index
    %76 = vector.load %arg22[%c0_67, %c0_68] : memref<1x32xf32, #tpu.memory_space<vmem>>, vector<1x32xf32>
    %c0_69 = arith.constant 0 : index
    %c0_70 = arith.constant 0 : index
    %77 = vector.load %arg31[%c0_69, %c0_70] : memref<1x32xf32, #tpu.memory_space<vmem>>, vector<1x32xf32>
    tpu.vector_store %arg31[%c0_69, %c0_70], %76 {strides = array<i32>} : memref<1x32xf32, #tpu.memory_space<vmem>>, vector<1x32xf32>,
    %c0_71 = arith.constant 0 : index
    %c0_72 = arith.constant 0 : index
    %78 = vector.load %arg20[%c0_71, %c0_72] : memref<1x32xf32, #tpu.memory_space<vmem>>, vector<1x32xf32>
    %c0_73 = arith.constant 0 : index
    %c0_74 = arith.constant 0 : index
    %79 = vector.load %arg32[%c0_73, %c0_74] : memref<1x32xf32, #tpu.memory_space<vmem>>, vector<1x32xf32>
    tpu.vector_store %arg32[%c0_73, %c0_74], %78 {strides = array<i32>} : memref<1x32xf32, #tpu.memory_space<vmem>>, vector<1x32xf32>,
    %c0_i32_75 = arith.constant 0 : i32
    %80 = arith.subi %72#0, %c0_i32_75 : i32
    %c1_i32_76 = arith.constant 1 : i32
    %c1_i32_77 = arith.constant 1 : i32
    %81 = arith.subi %c1_i32_76, %c1_i32_77 : i32
    %82 = arith.addi %80, %81 : i32
    %c1_i32_78 = arith.constant 1 : i32
    %83 = arith.divsi %82, %c1_i32_78 : i32
    %c1_i32_79 = arith.constant 1 : i32
    %c0_i32_80 = arith.constant 0 : i32
    %c0_i32_81 = arith.constant 0 : i32
    %84 = arith.subi %83, %c0_i32_81 : i32
    %85 = arith.addi %c0_i32_81, %84 : i32
    %c1_i32_82 = arith.constant 1 : i32
    scf.for %arg36 = %c0_i32_81 to %85 step %c1_i32_82  : i32 {
      %86 = arith.muli %arg36, %c1_i32_79 : i32
      %87 = arith.addi %c0_i32_80, %86 : i32
      %c0_83 = arith.constant 0 : index
      %c0_84 = arith.constant 0 : index
      %88 = vector.load %arg32[%c0_83, %c0_84] : memref<1x32xf32, #tpu.memory_space<vmem>>, vector<1x32xf32>
      %c0_85 = arith.constant 0 : index
      %c0_86 = arith.constant 0 : index
      %89 = vector.load %arg30[%c0_85, %c0_86] : memref<1x32xf32, #tpu.memory_space<vmem>>, vector<1x32xf32>
      %c0_87 = arith.constant 0 : index
      %c0_88 = arith.constant 0 : index
      %90 = vector.load %arg31[%c0_87, %c0_88] : memref<1x32xf32, #tpu.memory_space<vmem>>, vector<1x32xf32>
      %cst_89 = arith.constant dense<0.000000e+00> : vector<1x128xf32>
      %91 = tpu.matmul %88, %54, %cst_89 {dimension_numbers = #tpu.dot_dimension_numbers<[1], [0], [0], [1], [0, 0, 1, 1], [], []>} : vector<1x32xf32>, vector<32x128xf32>, vector<1x128xf32> -> vector<1x128xf32>
      %cst_90 = arith.constant dense<0.000000e+00> : vector<1x128xf32>
      %92 = tpu.matmul %89, %55, %cst_90 {dimension_numbers = #tpu.dot_dimension_numbers<[1], [0], [0], [1], [0, 0, 1, 1], [], []>} : vector<1x32xf32>, vector<32x128xf32>, vector<1x128xf32> -> vector<1x128xf32>
      %93 = arith.addf %91, %92 : vector<1x128xf32>
      %94 = arith.addf %93, %56 : vector<1x128xf32>
      %95 = vector.extract_strided_slice %94 {offsets = [0, 0], sizes = [1, 32], strides = [1, 1]} : vector<1x128xf32> to vector<1x32xf32>
      %96 = arith.negf %95 : vector<1x32xf32>
      %97 = math.exp %96 : vector<1x32xf32>
      %cst_91 = arith.constant 1.000000e+00 : f32
      %98 = vector.broadcast %cst_91 : f32 to vector<1x32xf32>
      %99 = arith.addf %98, %97 : vector<1x32xf32>
      %100 = arith.divf %98, %99 : vector<1x32xf32>
      %101 = vector.extract_strided_slice %94 {offsets = [0, 32], sizes = [1, 32], strides = [1, 1]} : vector<1x128xf32> to vector<1x32xf32>
      %102 = arith.negf %101 : vector<1x32xf32>
      %103 = math.exp %102 : vector<1x32xf32>
      %cst_92 = arith.constant 1.000000e+00 : f32
      %104 = vector.broadcast %cst_92 : f32 to vector<1x32xf32>
      %105 = arith.addf %104, %103 : vector<1x32xf32>
      %106 = arith.divf %104, %105 : vector<1x32xf32>
      %107 = vector.extract_strided_slice %94 {offsets = [0, 64], sizes = [1, 32], strides = [1, 1]} : vector<1x128xf32> to vector<1x32xf32>
      %108 = math.tanh %107 : vector<1x32xf32>
      %109 = vector.extract_strided_slice %94 {offsets = [0, 96], sizes = [1, 32], strides = [1, 1]} : vector<1x128xf32> to vector<1x32xf32>
      %110 = arith.negf %109 : vector<1x32xf32>
      %111 = math.exp %110 : vector<1x32xf32>
      %cst_93 = arith.constant 1.000000e+00 : f32
      %112 = vector.broadcast %cst_93 : f32 to vector<1x32xf32>
      %113 = arith.addf %112, %111 : vector<1x32xf32>
      %114 = arith.divf %112, %113 : vector<1x32xf32>
      %115 = arith.mulf %106, %90 : vector<1x32xf32>
      %116 = arith.mulf %100, %108 : vector<1x32xf32>
      %117 = arith.addf %115, %116 : vector<1x32xf32>
      %118 = math.tanh %117 : vector<1x32xf32>
      %119 = arith.mulf %114, %118 : vector<1x32xf32>
      %c0_94 = arith.constant 0 : index
      %c0_95 = arith.constant 0 : index
      %120 = vector.load %arg30[%c0_94, %c0_95] : memref<1x32xf32, #tpu.memory_space<vmem>>, vector<1x32xf32>
      tpu.vector_store %arg30[%c0_94, %c0_95], %119 {strides = array<i32>} : memref<1x32xf32, #tpu.memory_space<vmem>>, vector<1x32xf32>,
      %c0_96 = arith.constant 0 : index
      %c0_97 = arith.constant 0 : index
      %121 = vector.load %arg31[%c0_96, %c0_97] : memref<1x32xf32, #tpu.memory_space<vmem>>, vector<1x32xf32>
      tpu.vector_store %arg31[%c0_96, %c0_97], %117 {strides = array<i32>} : memref<1x32xf32, #tpu.memory_space<vmem>>, vector<1x32xf32>,
      %c0_98 = arith.constant 0 : index
      %c0_99 = arith.constant 0 : index
      %122 = vector.load %arg29[%c0_98, %c0_99] : memref<32x64xf32, #tpu.memory_space<vmem>>, vector<32x64xf32>
      %c0_100 = arith.constant 0 : index
      %c0_101 = arith.constant 0 : index
      %123 = vector.load %arg27[%c0_100, %c0_101] : memref<64x32xf32, #tpu.memory_space<vmem>>, vector<64x32xf32>
      %cst_102 = arith.constant dense<0.000000e+00> : vector<32x1xf32>
      %124 = tpu.matmul %57, %119, %cst_102 {dimension_numbers = #tpu.dot_dimension_numbers<[1], [1], [0], [0], [0, 0, 1, 0], [], []>} : vector<32x32xf32>, vector<1x32xf32>, vector<32x1xf32> -> vector<32x1xf32>
      %125 = vector.broadcast %124 : vector<32x1xf32> to vector<32x64xf32>
      %126 = arith.addf %122, %125 : vector<32x64xf32>
      %127 = math.tanh %126 : vector<32x64xf32>
      %cst_103 = arith.constant dense<0.000000e+00> : vector<1x64xf32>
      %128 = tpu.matmul %59, %127, %cst_103 {dimension_numbers = #tpu.dot_dimension_numbers<[1], [0], [0], [1], [0, 0, 1, 1], [], []>} : vector<1x32xf32>, vector<32x64xf32>, vector<1x64xf32> -> vector<1x64xf32>
      %cst_104 = arith.constant -1.000000e+30 : f32
      %129 = vector.broadcast %cst_104 : f32 to vector<1x64xf32>
      %130 = arith.select %8, %128, %129 : vector<1x64xi1>, vector<1x64xf32>
      %cst_105 = arith.constant dense<0xFF800000> : vector<1xf32>
      %131 = vector.multi_reduction <maximumf>, %130, %cst_105 [1] : vector<1x64xf32> to vector<1xf32>
      %132 = vector.shape_cast %131 : vector<1xf32> to vector<1x1xf32>
      %133 = vector.broadcast %132 : vector<1x1xf32> to vector<1x64xf32>
      %134 = arith.subf %130, %133 : vector<1x64xf32>
      %135 = math.exp %134 : vector<1x64xf32>
      %cst_106 = arith.constant 0.000000e+00 : f32
      %136 = vector.broadcast %cst_106 : f32 to vector<1x64xf32>
      %137 = arith.select %8, %135, %136 : vector<1x64xi1>, vector<1x64xf32>
      %cst_107 = arith.constant dense<0.000000e+00> : vector<1xf32>
      %138 = vector.multi_reduction <add>, %137, %cst_107 [1] : vector<1x64xf32> to vector<1xf32>
      %139 = vector.shape_cast %138 : vector<1xf32> to vector<1x1xf32>
      %140 = tpu.reciprocal %139 : vector<1x1xf32> -> vector<1x1xf32>
      %141 = vector.broadcast %140 : vector<1x1xf32> to vector<1x64xf32>
      %142 = arith.mulf %137, %141 : vector<1x64xf32>
      %cst_108 = arith.constant dense<0.000000e+00> : vector<1x32xf32>
      %143 = tpu.matmul %142, %123, %cst_108 {dimension_numbers = #tpu.dot_dimension_numbers<[1], [0], [0], [1], [0, 0, 1, 1], [], []>} : vector<1x64xf32>, vector<64x32xf32>, vector<1x32xf32> -> vector<1x32xf32>
      %c0_109 = arith.constant 0 : index
      %c0_110 = arith.constant 0 : index
      %144 = vector.load %arg28[%c0_109, %c0_110] : memref<32x64xf32, #tpu.memory_space<vmem>>, vector<32x64xf32>
      %c0_111 = arith.constant 0 : index
      %c0_112 = arith.constant 0 : index
      %145 = vector.load %arg26[%c0_111, %c0_112] : memref<64x32xf32, #tpu.memory_space<vmem>>, vector<64x32xf32>
      %cst_113 = arith.constant dense<0.000000e+00> : vector<32x1xf32>
      %146 = tpu.matmul %58, %143, %cst_113 {dimension_numbers = #tpu.dot_dimension_numbers<[1], [1], [0], [0], [0, 0, 1, 0], [], []>} : vector<32x32xf32>, vector<1x32xf32>, vector<32x1xf32> -> vector<32x1xf32>
      %147 = vector.broadcast %146 : vector<32x1xf32> to vector<32x64xf32>
      %148 = arith.addf %144, %147 : vector<32x64xf32>
      %149 = math.tanh %148 : vector<32x64xf32>
      %cst_114 = arith.constant dense<0.000000e+00> : vector<1x64xf32>
      %150 = tpu.matmul %60, %149, %cst_114 {dimension_numbers = #tpu.dot_dimension_numbers<[1], [0], [0], [1], [0, 0, 1, 1], [], []>} : vector<1x32xf32>, vector<32x64xf32>, vector<1x64xf32> -> vector<1x64xf32>
      %cst_115 = arith.constant -1.000000e+30 : f32
      %151 = vector.broadcast %cst_115 : f32 to vector<1x64xf32>
      %152 = arith.select %8, %150, %151 : vector<1x64xi1>, vector<1x64xf32>
      %cst_116 = arith.constant dense<0xFF800000> : vector<1xf32>
      %153 = vector.multi_reduction <maximumf>, %152, %cst_116 [1] : vector<1x64xf32> to vector<1xf32>
      %154 = vector.shape_cast %153 : vector<1xf32> to vector<1x1xf32>
      %155 = vector.broadcast %154 : vector<1x1xf32> to vector<1x64xf32>
      %156 = arith.subf %152, %155 : vector<1x64xf32>
      %157 = math.exp %156 : vector<1x64xf32>
      %cst_117 = arith.constant 0.000000e+00 : f32
      %158 = vector.broadcast %cst_117 : f32 to vector<1x64xf32>
      %159 = arith.select %8, %157, %158 : vector<1x64xi1>, vector<1x64xf32>
      %cst_118 = arith.constant dense<0.000000e+00> : vector<1xf32>
      %160 = vector.multi_reduction <add>, %159, %cst_118 [1] : vector<1x64xf32> to vector<1xf32>
      %161 = vector.shape_cast %160 : vector<1xf32> to vector<1x1xf32>
      %162 = tpu.reciprocal %161 : vector<1x1xf32> -> vector<1x1xf32>
      %163 = vector.broadcast %162 : vector<1x1xf32> to vector<1x64xf32>
      %164 = arith.mulf %159, %163 : vector<1x64xf32>
      %cst_119 = arith.constant dense<0.000000e+00> : vector<1x32xf32>
      %165 = tpu.matmul %164, %145, %cst_119 {dimension_numbers = #tpu.dot_dimension_numbers<[1], [0], [0], [1], [0, 0, 1, 1], [], []>} : vector<1x64xf32>, vector<64x32xf32>, vector<1x32xf32> -> vector<1x32xf32>
      %cst_120 = arith.constant dense<0.000000e+00> : vector<1x1xf32>
      %166 = tpu.matmul %165, %61, %cst_120 {dimension_numbers = #tpu.dot_dimension_numbers<[1], [0], [0], [1], [0, 0, 1, 1], [], []>} : vector<1x32xf32>, vector<32x1xf32>, vector<1x1xf32> -> vector<1x1xf32>
      %167 = arith.addf %166, %62 : vector<1x1xf32>
      %c0_121 = arith.constant 0 : index
      %c0_122 = arith.constant 0 : index
      %168 = vector.load %arg35[%c0_121, %c0_122] : memref<1x1xf32, #tpu.memory_space<vmem>>, vector<1x1xf32>
      tpu.vector_store %arg35[%c0_121, %c0_122], %167 {strides = array<i32>} : memref<1x1xf32, #tpu.memory_space<vmem>>, vector<1x1xf32>,
      %c0_123 = arith.constant 0 : index
      %c0_124 = arith.constant 0 : index
      %169 = vector.load %arg35[%c0_123, %c0_124] : memref<1x1xf32, #tpu.memory_space<vmem>>, vector<1x1xf32>
      %170 = vector.extract %169[0, 0] : f32 from vector<1x1xf32>
      %171 = arith.index_cast %87 : i32 to index
      %172 = memref.load %arg25[%171] : memref<128xf32, #tpu.memory_space<smem>>
      memref.store %170, %arg25[%171] : memref<128xf32, #tpu.memory_space<smem>>
      %c0_125 = arith.constant 0 : index
      %c0_126 = arith.constant 0 : index
      %173 = vector.load %arg32[%c0_125, %c0_126] : memref<1x32xf32, #tpu.memory_space<vmem>>, vector<1x32xf32>
      tpu.vector_store %arg32[%c0_125, %c0_126], %165 {strides = array<i32>} : memref<1x32xf32, #tpu.memory_space<vmem>>, vector<1x32xf32>,
    }
    return
  }
}

</mosaic_0001>

<llo_original>
// kernel: tpu_custom_call.1
$region0: #{tpu_custom_call.1}
  #allocation0 [shape = 'u32[]', space=smem, size = 0x4, offset = 0x4, fixed_abs, tag = 'smem constant byte address 0x4 - core index']
  #allocation1 [shape = 'u32[144,128]{1,0:T(1,128)}', space=vmem, size = 0x12000, scoped, tag = 'internal scratch']
  #allocation2 [shape = 'f32[64,32]{1,0:T(8,128)}', space=vmem, size = 0x8000, scoped, tag = 'scratch operand']
  #allocation3 [shape = 'f32[64,32]{1,0:T(8,128)}', space=vmem, size = 0x8000, scoped, tag = 'scratch operand']
  #allocation4 [shape = 'f32[32,64]{1,0:T(8,128)}', space=vmem, size = 0x4000, scoped, tag = 'scratch operand']
  #allocation5 [shape = 'f32[32,64]{1,0:T(8,128)}', space=vmem, size = 0x4000, scoped, tag = 'scratch operand']
  #allocation6 [shape = 'f32[1,32]{1,0:T(1,128)}', space=vmem, size = 0x200, scoped, tag = 'scratch operand']
  #allocation7 [shape = 'f32[1,32]{1,0:T(1,128)}', space=vmem, size = 0x200, scoped, tag = 'scratch operand']
  #allocation8 [shape = 'f32[1,32]{1,0:T(1,128)}', space=vmem, size = 0x200, scoped, tag = 'scratch operand']
  #allocation9 [shape = 'f32[1,64]{1,0:T(1,128)}', space=vmem, size = 0x200, scoped, tag = 'scratch operand']
  #allocation10 [shape = 's32[1,1]{1,0:T(1,128)}', space=vmem, size = 0x200, scoped, tag = 'scratch operand']
  #allocation11 [shape = 'f32[1,1]{1,0:T(1,128)}', space=vmem, size = 0x200, scoped, tag = 'scratch operand']
  #allocation12 [shape = 's32[1]{0:T(128)S(6)}', space=smem, size = 0x200, scoped, tag = 'scoped memory for tpu_custom_call.1']
  #allocation13 [shape = 'f32[1,1]{1,0:T(1,128)S(1)}', space=vmem, size = 0x200, scoped, tag = 'scoped memory for tpu_custom_call.1']
  %s0 = inlined_call_operand.<no memory space> [shape: s32[1], index: 0, kind: input, shape index: {}]
  %s1 = inlined_call_operand.vmem [shape: s32[64], index: 1, kind: input, shape index: {}]
  %s2 = inlined_call_operand.vmem [shape: s32[1,64], index: 2, kind: input, shape index: {}]
  %s3 = inlined_call_operand.vmem [shape: f32[64,32], index: 3, kind: input, shape index: {}]
  %s4 = inlined_call_operand.vmem [shape: f32[32,64], index: 4, kind: input, shape index: {}]
  %s5 = inlined_call_operand.vmem [shape: f32[1,32], index: 5, kind: input, shape index: {}]
  %s6 = inlined_call_operand.vmem [shape: f32[1,32], index: 6, kind: input, shape index: {}]
  %s7 = inlined_call_operand.vmem [shape: f32[32,1], index: 7, kind: input, shape index: {}]
  %s8 = inlined_call_operand.vmem [shape: f32[32,1], index: 8, kind: input, shape index: {}]
  %s9 = inlined_call_operand.vmem [shape: f32[32,32], index: 9, kind: input, shape index: {}]
  %s10 = inlined_call_operand.vmem [shape: f32[64,32], index: 10, kind: input, shape index: {}]
  %s11 = inlined_call_operand.vmem [shape: f32[32,128], index: 11, kind: input, shape index: {}]
  %s12 = inlined_call_operand.vmem [shape: f32[32,128], index: 12, kind: input, shape index: {}]
  %s13 = inlined_call_operand.vmem [shape: f32[1,128], index: 13, kind: input, shape index: {}]
  %s14 = inlined_call_operand.vmem [shape: f32[32,32], index: 14, kind: input, shape index: {}]
  %s15 = inlined_call_operand.vmem [shape: f32[1,32], index: 15, kind: input, shape index: {}]
  %s16 = inlined_call_operand.vmem [shape: f32[32,32], index: 16, kind: input, shape index: {}]
  %s17 = inlined_call_operand.vmem [shape: f32[1,32], index: 17, kind: input, shape index: {}]
  %s18 = inlined_call_operand.vmem [shape: f32[32,1], index: 18, kind: input, shape index: {}]
  %s19 = inlined_call_operand.<no memory space> [shape: f32[1,1], index: 19, kind: input, shape index: {}]
  %s20 = inlined_call_operand.vmem [shape: f32[1,32], index: 20, kind: input, shape index: {}]
  %s21 = inlined_call_operand.vmem [shape: f32[1,32], index: 21, kind: input, shape index: {}]
  %s22 = inlined_call_operand.vmem [shape: f32[1,32], index: 22, kind: input, shape index: {}]
  %s23 = inlined_call_operand.hbm [shape: s32[128], index: 23, kind: output, shape index: {0}]
  %s24 = inlined_call_operand.hbm [shape: s32[1], index: 24, kind: output, shape index: {1}]
  %s25 = inlined_call_operand.hbm [shape: f32[128], index: 25, kind: output, shape index: {2}]
  %26 = xla_tuple %s23, %s24, %s25
  %s27 = sld [smem:[#allocation0]]
  $region136: #{tpu_custom_call.1} parent=0
    _
  %s29 = ssub.s32 1, %s27
  %s30 = scalar_select 0, %s29, %s27
  %31 = sst [smem:[#allocation12]] %s0
  %v32 = vstv %s19
  %33 = vst [vmem:[#allocation13] sm:$0x1] %v32
  $region1: #{tpu_custom_call.1} parent=0
    #allocation14 [shape = 'u8[512]{0}', space=smem, size = 0x200, scoped, tag = 'input window, operand 1, single buffered']
    #allocation15 [shape = 's32[1]{0}', space=sflag, size = 0x4, scoped, tag = 'scoped memory for tpu_custom_call.1']
    #allocation16 [shape = 's32[1]{0}', space=sflag, size = 0x4, scoped, tag = 'scoped memory for tpu_custom_call.1']
    #allocation17 [shape = 'u8[512]{0}', space=smem, size = 0x200, scoped, tag = 'output window, operand 0, single buffered']
    #allocation18 [shape = 'u8[512]{0}', space=smem, size = 0x200, scoped, tag = 'output window, operand 1, single buffered']
    #allocation19 [shape = 's32[1]{0}', space=sflag, size = 0x4, scoped, tag = 'scoped memory for tpu_custom_call.1']
    #allocation20 [shape = 'u8[512]{0}', space=smem, size = 0x200, scoped, tag = 'output window, operand 2, single buffered']
    %34 = vsyncpa [#allocation16], 0
    %35 = vsyncpa [#allocation15], 0
    %36 = vsyncpa [#allocation19], 0
    // Predicated region
    $region2: #{tpu_custom_call.1} parent=1 // pred_check
      _
    $region3: #{tpu_custom_call.1} parent=1 // pred_check_branch
      %38 = sbr.rel (0) target = $region5
    $region4: #{tpu_custom_call.1} parent=1 // pred_region
      _
    $region5: #{tpu_custom_call.1} parent=1 // pred_fallthru
      _
    // Predicated region
    $region6: #{tpu_custom_call.1} parent=1 // pred_check
      _
    $region7: #{tpu_custom_call.1} parent=1 // pred_check_branch
      %40 = sbr.rel (0) target = $region9
    $region8: #{tpu_custom_call.1} parent=1 // pred_region
      %s42 = ssub.s32 16, 16
      %43 = vsyncadd [#allocation16], %s42
      %s45 = sshll.u32 %s1, 4
      %s46 = int_to_ptr.vmem [resolvable:$true] %s45
      %48 = dma.vmem_to_smem %s46, 16, [#allocation14], [#allocation16]
    $region9: #{tpu_custom_call.1} parent=1 // pred_fallthru
      _
    // Predicated region
    $region10: #{tpu_custom_call.1} parent=1 // pred_check
      _
    $region11: #{tpu_custom_call.1} parent=1 // pred_check_branch
      %50 = sbr.rel (0) target = $region13
    $region12: #{tpu_custom_call.1} parent=1 // pred_region
      _
    $region13: #{tpu_custom_call.1} parent=1 // pred_fallthru
      _
    // Predicated region
    $region14: #{tpu_custom_call.1} parent=1 // pred_check
      _
    $region15: #{tpu_custom_call.1} parent=1 // pred_check_branch
      %52 = sbr.rel (0) target = $region17
    $region16: #{tpu_custom_call.1} parent=1 // pred_region
      _
    $region17: #{tpu_custom_call.1} parent=1 // pred_fallthru
      _
    // Predicated region
    $region18: #{tpu_custom_call.1} parent=1 // pred_check
      _
    $region19: #{tpu_custom_call.1} parent=1 // pred_check_branch
      %54 = sbr.rel (0) target = $region21
    $region20: #{tpu_custom_call.1} parent=1 // pred_region
      _
    $region21: #{tpu_custom_call.1} parent=1 // pred_fallthru
      _
    // Predicated region
    $region22: #{tpu_custom_call.1} parent=1 // pred_check
      _
    $region23: #{tpu_custom_call.1} parent=1 // pred_check_branch
      %56 = sbr.rel (0) target = $region25
    $region24: #{tpu_custom_call.1} parent=1 // pred_region
      _
    $region25: #{tpu_custom_call.1} parent=1 // pred_fallthru
      _
    // Predicated region
    $region26: #{tpu_custom_call.1} parent=1 // pred_check
      _
    $region27: #{tpu_custom_call.1} parent=1 // pred_check_branch
      %58 = sbr.rel (0) target = $region29
    $region28: #{tpu_custom_call.1} parent=1 // pred_region
      _
    $region29: #{tpu_custom_call.1} parent=1 // pred_fallthru
      _
    // Predicated region
    $region30: #{tpu_custom_call.1} parent=1 // pred_check
      _
    $region31: #{tpu_custom_call.1} parent=1 // pred_check_branch
      %60 = sbr.rel (0) target = $region33
    $region32: #{tpu_custom_call.1} parent=1 // pred_region
      _
    $region33: #{tpu_custom_call.1} parent=1 // pred_fallthru
      _
    // Predicated region
    $region34: #{tpu_custom_call.1} parent=1 // pred_check
      _
    $region35: #{tpu_custom_call.1} parent=1 // pred_check_branch
      %62 = sbr.rel (0) target = $region37
    $region36: #{tpu_custom_call.1} parent=1 // pred_region
      _
    $region37: #{tpu_custom_call.1} parent=1 // pred_fallthru
      _
    // Predicated region
    $region38: #{tpu_custom_call.1} parent=1 // pred_check
      _
    $region39: #{tpu_custom_call.1} parent=1 // pred_check_branch
      %64 = sbr.rel (0) target = $region41
    $region40: #{tpu_custom_call.1} parent=1 // pred_region
      _
    $region41: #{tpu_custom_call.1} parent=1 // pred_fallthru
      _
    // Predicated region
    $region42: #{tpu_custom_call.1} parent=1 // pred_check
      _
    $region43: #{tpu_custom_call.1} parent=1 // pred_check_branch
      %66 = sbr.rel (0) target = $region45
    $region44: #{tpu_custom_call.1} parent=1 // pred_region
      _
    $region45: #{tpu_custom_call.1} parent=1 // pred_fallthru
      _
    // Predicated region
    $region46: #{tpu_custom_call.1} parent=1 // pred_check
      _
    $region47: #{tpu_custom_call.1} parent=1 // pred_check_branch
      %68 = sbr.rel (0) target = $region49
    $region48: #{tpu_custom_call.1} parent=1 // pred_region
      _
    $region49: #{tpu_custom_call.1} parent=1 // pred_fallthru
      _
    // Predicated region
    $region50: #{tpu_custom_call.1} parent=1 // pred_check
      _
    $region51: #{tpu_custom_call.1} parent=1 // pred_check_branch
      %70 = sbr.rel (0) target = $region53
    $region52: #{tpu_custom_call.1} parent=1 // pred_region
      _
    $region53: #{tpu_custom_call.1} parent=1 // pred_fallthru
      _
    // Predicated region
    $region54: #{tpu_custom_call.1} parent=1 // pred_check
      _
    $region55: #{tpu_custom_call.1} parent=1 // pred_check_branch
      %72 = sbr.rel (0) target = $region57
    $region56: #{tpu_custom_call.1} parent=1 // pred_region
      _
    $region57: #{tpu_custom_call.1} parent=1 // pred_fallthru
      _
    // Predicated region
    $region58: #{tpu_custom_call.1} parent=1 // pred_check
      _
    $region59: #{tpu_custom_call.1} parent=1 // pred_check_branch
      %74 = sbr.rel (0) target = $region61
    $region60: #{tpu_custom_call.1} parent=1 // pred_region
      _
    $region61: #{tpu_custom_call.1} parent=1 // pred_fallthru
      _
    // Predicated region
    $region62: #{tpu_custom_call.1} parent=1 // pred_check
      _
    $region63: #{tpu_custom_call.1} parent=1 // pred_check_branch
      %76 = sbr.rel (0) target = $region65
    $region64: #{tpu_custom_call.1} parent=1 // pred_region
      _
    $region65: #{tpu_custom_call.1} parent=1 // pred_fallthru
      _
    // Predicated region
    $region66: #{tpu_custom_call.1} parent=1 // pred_check
      _
    $region67: #{tpu_custom_call.1} parent=1 // pred_check_branch
      %78 = sbr.rel (0) target = $region69
    $region68: #{tpu_custom_call.1} parent=1 // pred_region
      _
    $region69: #{tpu_custom_call.1} parent=1 // pred_fallthru
      _
    // Predicated region
    $region70: #{tpu_custom_call.1} parent=1 // pred_check
      _
    $region71: #{tpu_custom_call.1} parent=1 // pred_check_branch
      %80 = sbr.rel (0) target = $region73
    $region72: #{tpu_custom_call.1} parent=1 // pred_region
      _
    $region73: #{tpu_custom_call.1} parent=1 // pred_fallthru
      _
    // Predicated region
    $region74: #{tpu_custom_call.1} parent=1 // pred_check
      _
    $region75: #{tpu_custom_call.1} parent=1 // pred_check_branch
      %82 = sbr.rel (0) target = $region77
    $region76: #{tpu_custom_call.1} parent=1 // pred_region
      _
    $region77: #{tpu_custom_call.1} parent=1 // pred_fallthru
      _
    // Predicated region
    $region78: #{tpu_custom_call.1} parent=1 // pred_check
      _
    $region79: #{tpu_custom_call.1} parent=1 // pred_check_branch
      %84 = sbr.rel (0) target = $region81
    $region80: #{tpu_custom_call.1} parent=1 // pred_region
      _
    $region81: #{tpu_custom_call.1} parent=1 // pred_fallthru
      _
    // Predicated region
    $region82: #{tpu_custom_call.1} parent=1 // pred_check
      _
    $region83: #{tpu_custom_call.1} parent=1 // pred_check_branch
      %86 = sbr.rel (0) target = $region85
    $region84: #{tpu_custom_call.1} parent=1 // pred_region
      _
    $region85: #{tpu_custom_call.1} parent=1 // pred_fallthru
      _
    // Predicated region
    $region86: #{tpu_custom_call.1} parent=1 // pred_check
      _
    $region87: #{tpu_custom_call.1} parent=1 // pred_check_branch
      %88 = sbr.rel (0) target = $region89
    $region88: #{tpu_custom_call.1} parent=1 // pred_region
      _
    $region89: #{tpu_custom_call.1} parent=1 // pred_fallthru
      _
    // Predicated region
    $region90: #{tpu_custom_call.1} parent=1 // pred_check
      _
    $region91: #{tpu_custom_call.1} parent=1 // pred_check_branch
      %90 = sbr.rel (0) target = $region93
    $region92: #{tpu_custom_call.1} parent=1 // pred_region
      _
    $region93: #{tpu_custom_call.1} parent=1 // pred_fallthru
      _
    // Predicated region
    $region94: #{tpu_custom_call.1} parent=1 // pred_check
      _
    $region95: #{tpu_custom_call.1} parent=1 // pred_check_branch
      %92 = sbr.rel (0) target = $region97
    $region96: #{tpu_custom_call.1} parent=1 // pred_region
      %93 = dma.done [#allocation16], 16
    $region97: #{tpu_custom_call.1} parent=1 // pred_fallthru
      _
    %94 = sfence
    %s95 = sld [smem:[#allocation12]]
    %s96 = sadd.s32 %s95, 1
    %v97 = vlaneseq
    %v98 = vand.u32 %v97, 127
    %v99 = vcvt.s32.f32 %v98
    %s100 = sadd.s32 %s95, 2
    %v101 = vstv %s100
    %vm102 = vcmp.lt.s32.totalorder %v98, %v101
    %v103 = vstv %s95
    %vm104 = vcmp.lt.s32.totalorder %v98, %v103
    %vm105 = vcmp.eq.s32.totalorder %v98, %v103
    %v106 = vstv %s96
    %vm107 = vcmp.eq.s32.totalorder %v98, %v106
    %v108 = vlaneseq
    %v109 = vshrl.u32 %v108, 7
    %v110 = vadd.s32 %v109, 8
    %v111 = vadd.s32 %v109, 16
    %v112 = vadd.s32 %v109, 24
    %v113 = vadd.s32 %v109, 32
    %v114 = vadd.s32 %v109, 40
    %v115 = vadd.s32 %v109, 48
    %v116 = vadd.s32 %v109, 56
    %vm117 = vcmp.eq.s32.totalorder %v109, %v103
    %vm118 = vcmp.eq.s32.totalorder %v110, %v103
    %vm119 = vcmp.eq.s32.totalorder %v111, %v103
    %vm120 = vcmp.eq.s32.totalorder %v112, %v103
    %vm121 = vcmp.eq.s32.totalorder %v113, %v103
    %vm122 = vcmp.eq.s32.totalorder %v114, %v103
    %vm123 = vcmp.eq.s32.totalorder %v115, %v103
    %vm124 = vcmp.eq.s32.totalorder %v116, %v103
    %v125 = vld [vmem:[%s5] sm:$0x1]
    %vm126 = vcmp.eq.s32.totalorder %v109, %v106
    %vm127 = vcmp.eq.s32.totalorder %v110, %v106
    %vm128 = vcmp.eq.s32.totalorder %v111, %v106
    %vm129 = vcmp.eq.s32.totalorder %v112, %v106
    %vm130 = vcmp.eq.s32.totalorder %v113, %v106
    %vm131 = vcmp.eq.s32.totalorder %v114, %v106
    %vm132 = vcmp.eq.s32.totalorder %v115, %v106
    %vm133 = vcmp.eq.s32.totalorder %v116, %v106
    %v134 = vld [vmem:[%s6] sm:$0x1]
    %v135 = vld [vmem:[%s3] sm:$0xff]
    %v136 = vld [vmem:[%s3 + $0x8] sm:$0xff]
    %v137 = vld [vmem:[%s3 + $0x10] sm:$0xff]
    %v138 = vld [vmem:[%s3 + $0x18] sm:$0xff]
    %v139 = vld [vmem:[%s3 + $0x20] sm:$0xff]
    %v140 = vld [vmem:[%s3 + $0x28] sm:$0xff]
    %v141 = vld [vmem:[%s3 + $0x30] sm:$0xff]
    %v142 = vld [vmem:[%s3 + $0x38] sm:$0xff]
    %v143 = vsel %vm126, 1, 0
    %v144 = vsel %vm127, 1, 0
    %v145 = vsel %vm128, 1, 0
    %v146 = vsel %vm129, 1, 0
    %v147 = vsel %vm130, 1, 0
    %v148 = vsel %vm131, 1, 0
    %v149 = vsel %vm132, 1, 0
    %v150 = vsel %vm133, 1, 0
    %vm151 = vcmp.eq.s32.totalorder %v143, 1
    %vm152 = vcmp.eq.s32.totalorder %v144, 1
    %vm153 = vcmp.eq.s32.totalorder %v145, 1
    %vm154 = vcmp.eq.s32.totalorder %v146, 1
    %vm155 = vcmp.eq.s32.totalorder %v147, 1
    %vm156 = vcmp.eq.s32.totalorder %v148, 1
    %vm157 = vcmp.eq.s32.totalorder %v149, 1
    %vm158 = vcmp.eq.s32.totalorder %v150, 1
    %v160 = vlaneseq
    %v161 = vshrl.u32 %v160, 7
    %v162 = vsub.s32 0, %v161
    %v163 = vrot.slane %v134, %v162
    %v165 = vsel %vm151, %v163, %v135
    %v166 = vsel %vm152, %v163, %v136
    %v167 = vsel %vm153, %v163, %v137
    %v168 = vsel %vm154, %v163, %v138
    %v169 = vsel %vm155, %v163, %v139
    %v170 = vsel %vm156, %v163, %v140
    %v171 = vsel %vm157, %v163, %v141
    %v172 = vsel %vm158, %v163, %v142
    %v173 = vsel %vm117, 1, 0
    %v174 = vsel %vm118, 1, 0
    %v175 = vsel %vm119, 1, 0
    %v176 = vsel %vm120, 1, 0
    %v177 = vsel %vm121, 1, 0
    %v178 = vsel %vm122, 1, 0
    %v179 = vsel %vm123, 1, 0
    %v180 = vsel %vm124, 1, 0
    %vm181 = vcmp.eq.s32.totalorder %v173, 1
    %vm182 = vcmp.eq.s32.totalorder %v174, 1
    %vm183 = vcmp.eq.s32.totalorder %v175, 1
    %vm184 = vcmp.eq.s32.totalorder %v176, 1
    %vm185 = vcmp.eq.s32.totalorder %v177, 1
    %vm186 = vcmp.eq.s32.totalorder %v178, 1
    %vm187 = vcmp.eq.s32.totalorder %v179, 1
    %vm188 = vcmp.eq.s32.totalorder %v180, 1
    %v190 = vlaneseq
    %v191 = vshrl.u32 %v190, 7
    %v192 = vsub.s32 0, %v191
    %v193 = vrot.slane %v125, %v192
    %v195 = vsel %vm181, %v193, %v165
    %v196 = vsel %vm182, %v193, %v166
    %v197 = vsel %vm183, %v193, %v167
    %v198 = vsel %vm184, %v193, %v168
    %v199 = vsel %vm185, %v193, %v169
    %v200 = vsel %vm186, %v193, %v170
    %v201 = vsel %vm187, %v193, %v171
    %v202 = vsel %vm188, %v193, %v172
    %vm203 = vcmask 261120
    %204 = vst.msk [vmem:[#allocation2] sm:$0xff] %vm203, %v195
    %205 = vst.msk [vmem:[#allocation2 + $0x8] sm:$0xff] %vm203, %v196
    %206 = vst.msk [vmem:[#allocation2 + $0x10] sm:$0xff] %vm203, %v197
    %207 = vst.msk [vmem:[#allocation2 + $0x18] sm:$0xff] %vm203, %v198
    %208 = vst.msk [vmem:[#allocation2 + $0x20] sm:$0xff] %vm203, %v199
    %209 = vst.msk [vmem:[#allocation2 + $0x28] sm:$0xff] %vm203, %v200
    %210 = vst.msk [vmem:[#allocation2 + $0x30] sm:$0xff] %vm203, %v201
    %211 = vst.msk [vmem:[#allocation2 + $0x38] sm:$0xff] %vm203, %v202
    %v212 = vld [vmem:[%s9] sm:$0xff]
    %v213 = vld [vmem:[%s9 + $0x8] sm:$0xff]
    %v214 = vld [vmem:[%s9 + $0x10] sm:$0xff]
    %v215 = vld [vmem:[%s9 + $0x18] sm:$0xff]
    %v217 = vsel %vm203, %v195, 0
    %v220 = vsel %vm203, %v196, 0
    %v223 = vsel %vm203, %v197, 0
    %v226 = vsel %vm203, %v198, 0
    %v229 = vsel %vm203, %v199, 0
    %v232 = vsel %vm203, %v200, 0
    %v235 = vsel %vm203, %v201, 0
    %v238 = vsel %vm203, %v202, 0
    %240 = vmatprep.subr.mxu0 0.0
    %241 = vmatpush1.msra.mxu0 0.0
    %242 = vmatprep.subr.mxu0 0.0
    %243 = vmatpush1.msra.mxu0 0.0
    %244 = vmatprep.subr.mxu0 0.0
    %245 = vmatpush1.msra.mxu0 0.0
    %246 = vmatprep.subr.mxu0 0.0
    %247 = vmatpush1.msra.mxu0 0.0
    %248 = vmatprep.subr.mxu0 0.0
    %249 = vmatpush1.msra.mxu0 0.0
    %250 = vmatprep.subr.mxu0 0.0
    %251 = vmatpush1.msra.mxu0 0.0
    %252 = vmatprep.subr.mxu0 0.0
    %253 = vmatpush1.msra.mxu0 0.0
    %254 = vmatprep.subr.mxu0 0.0
    %255 = vmatpush1.msra.mxu0 0.0
    %256 = vmatprep.subr.mxu0 0.0
    %257 = vmatpush1.msra.mxu0 0.0
    %258 = vmatprep.subr.mxu0 0.0
    %259 = vmatpush1.msra.mxu0 0.0
    %260 = vmatprep.subr.mxu0 0.0
    %261 = vmatpush1.msra.mxu0 0.0
    %262 = vmatprep.subr.mxu0 0.0
    %263 = vmatpush1.msra.mxu0 0.0
    %264 = vmatprep.subr.mxu0 0.0
    %265 = vmatpush1.msra.mxu0 %v215
    %266 = vmatprep.subr.mxu0 0.0
    %267 = vmatpush1.msra.mxu0 %v214
    %268 = vmatprep.subr.mxu0 0.0
    %269 = vmatpush1.msra.mxu0 %v213
    %270 = vmatprep.subr.mxu0 0.0
    %271 = vmatpush1.msra.mxu0 %v212
    %272 = vmatprep.subr.mxu0 0.0
    %273 = vmatpush2.msra.mxu0 0.0
    %274 = vmatprep.subr.mxu0 0.0
    %275 = vmatpush2.msra.mxu0 0.0
    %276 = vmatprep.subr.mxu0 0.0
    %277 = vmatpush2.msra.mxu0 0.0
    %278 = vmatprep.subr.mxu0 0.0
    %279 = vmatpush2.msra.mxu0 0.0
    %280 = vmatprep.subr.mxu0 0.0
    %281 = vmatpush2.msra.mxu0 0.0
    %282 = vmatprep.subr.mxu0 0.0
    %283 = vmatpush2.msra.mxu0 0.0
    %284 = vmatprep.subr.mxu0 0.0
    %285 = vmatpush2.msra.mxu0 0.0
    %286 = vmatprep.subr.mxu0 0.0
    %287 = vmatpush2.msra.mxu0 0.0
    %288 = vmatprep.subr.mxu0 0.0
    %289 = vmatpush2.msra.mxu0 0.0
    %290 = vmatprep.subr.mxu0 0.0
    %291 = vmatpush2.msra.mxu0 0.0
    %292 = vmatprep.subr.mxu0 0.0
    %293 = vmatpush2.msra.mxu0 0.0
    %294 = vmatprep.subr.mxu0 0.0
    %295 = vmatpush2.msra.mxu0 0.0
    %296 = vmatprep.subr.mxu0 0.0
    %297 = vmatpush2.msra.mxu0 0.0
    %298 = vmatprep.subr.mxu0 0.0
    %299 = vmatpush2.msra.mxu0 0.0
    %300 = vmatprep.subr.mxu0 0.0
    %301 = vmatpush2.msra.mxu0 0.0
    %302 = vmatprep.subr.mxu0 0.0
    %303 = vmatpush2.msra.mxu0 0.0
    %304 = vmatprep.mubr.f32.mxu0 0.0
    %305 = vmatmul.mubr.f32.gmra.mxu0 %v217
    %v306 = vpop.f32.mrf.mxu0
    %v307 = vadd.f32 0.0, %v306
    %v308 = vpop.f32.mrf.mxu0
    %309 = vmatprep.mubr.f32.mxu0 0.0
    %310 = vmatmul.mubr.f32.gmra.mxu0 %v220
    %v311 = vpop.f32.mrf.mxu0
    %v312 = vadd.f32 0.0, %v311
    %v313 = vpop.f32.mrf.mxu0
    %314 = vmatprep.mubr.f32.mxu0 0.0
    %315 = vmatmul.mubr.f32.gmra.mxu0 %v223
    %v316 = vpop.f32.mrf.mxu0
    %v317 = vadd.f32 0.0, %v316
    %v318 = vpop.f32.mrf.mxu0
    %319 = vmatprep.mubr.f32.mxu0 0.0
    %320 = vmatmul.mubr.f32.gmra.mxu0 %v226
    %v321 = vpop.f32.mrf.mxu0
    %v322 = vadd.f32 0.0, %v321
    %v323 = vpop.f32.mrf.mxu0
    %324 = vmatprep.mubr.f32.mxu0 0.0
    %325 = vmatmul.mubr.f32.gmra.mxu0 %v229
    %v326 = vpop.f32.mrf.mxu0
    %v327 = vadd.f32 0.0, %v326
    %v328 = vpop.f32.mrf.mxu0
    %329 = vmatprep.mubr.f32.mxu0 0.0
    %330 = vmatmul.mubr.f32.gmra.mxu0 %v232
    %v331 = vpop.f32.mrf.mxu0
    %v332 = vadd.f32 0.0, %v331
    %v333 = vpop.f32.mrf.mxu0
    %334 = vmatprep.mubr.f32.mxu0 0.0
    %335 = vmatmul.mubr.f32.gmra.mxu0 %v235
    %v336 = vpop.f32.mrf.mxu0
    %v337 = vadd.f32 0.0, %v336
    %v338 = vpop.f32.mrf.mxu0
    %339 = vmatprep.mubr.f32.mxu0 0.0
    %340 = vmatmul.mubr.f32.gmra.mxu0 %v238
    %v341 = vpop.f32.mrf.mxu0
    %v342 = vadd.f32 0.0, %v341
    %v343 = vpop.f32.mrf.mxu0
    %344 = vdwg.mxu0
    %345 = vst.msk [vmem:[#allocation3] sm:$0xff] %vm203, %v307
    %346 = vst.msk [vmem:[#allocation3 + $0x8] sm:$0xff] %vm203, %v312
    %347 = vst.msk [vmem:[#allocation3 + $0x10] sm:$0xff] %vm203, %v317
    %348 = vst.msk [vmem:[#allocation3 + $0x18] sm:$0xff] %vm203, %v322
    %349 = vst.msk [vmem:[#allocation3 + $0x20] sm:$0xff] %vm203, %v327
    %350 = vst.msk [vmem:[#allocation3 + $0x28] sm:$0xff] %vm203, %v332
    %351 = vst.msk [vmem:[#allocation3 + $0x30] sm:$0xff] %vm203, %v337
    %352 = vst.msk [vmem:[#allocation3 + $0x38] sm:$0xff] %vm203, %v342
    %v353 = vld [vmem:[%s7] sm:$0xff]
    %v354 = vld [vmem:[%s7 + $0x8] sm:$0xff]
    %v355 = vld [vmem:[%s7 + $0x10] sm:$0xff]
    %v356 = vld [vmem:[%s7 + $0x18] sm:$0xff]
    %v357 = vld [vmem:[%s8] sm:$0xff]
    %v358 = vld [vmem:[%s8 + $0x8] sm:$0xff]
    %v359 = vld [vmem:[%s8 + $0x10] sm:$0xff]
    %v360 = vld [vmem:[%s8 + $0x18] sm:$0xff]
    %v361 = vld [vmem:[%s4] sm:$0xff]
    %v362 = vld [vmem:[%s4 + $0x8] sm:$0xff]
    %v363 = vld [vmem:[%s4 + $0x10] sm:$0xff]
    %v364 = vld [vmem:[%s4 + $0x18] sm:$0xff]
    %v365 = vsel %vm107, 1, 0
    %vm366 = vcmp.eq.s32.totalorder %v365, 1
    %368 = vset.pattern.permute.xlu0 0
    %369 = vperm.xlu0 %368, %v357
    %v370 = vpop.permute.xlu0 %369
    %373 = vset.pattern.permute.xlu0 0
    %374 = vperm.xlu0 %373, %v358
    %v375 = vpop.permute.xlu0 %374
    %378 = vset.pattern.permute.xlu0 0
    %379 = vperm.xlu0 %378, %v359
    %v380 = vpop.permute.xlu0 %379
    %383 = vset.pattern.permute.xlu0 0
    %384 = vperm.xlu0 %383, %v360
    %v385 = vpop.permute.xlu0 %384
    %v387 = vsel %vm366, %v370, %v361
    %v388 = vsel %vm366, %v375, %v362
    %v389 = vsel %vm366, %v380, %v363
    %v390 = vsel %vm366, %v385, %v364
    %v391 = vsel %vm105, 1, 0
    %vm392 = vcmp.eq.s32.totalorder %v391, 1
    %394 = vset.pattern.permute.xlu0 0
    %395 = vperm.xlu0 %394, %v353
    %v396 = vpop.permute.xlu0 %395
    %399 = vset.pattern.permute.xlu0 0
    %400 = vperm.xlu0 %399, %v354
    %v401 = vpop.permute.xlu0 %400
    %404 = vset.pattern.permute.xlu0 0
    %405 = vperm.xlu0 %404, %v355
    %v406 = vpop.permute.xlu0 %405
    %409 = vset.pattern.permute.xlu0 0
    %410 = vperm.xlu0 %409, %v356
    %v411 = vpop.permute.xlu0 %410
    %v413 = vsel %vm392, %v396, %v387
    %v414 = vsel %vm392, %v401, %v388
    %v415 = vsel %vm392, %v406, %v389
    %v416 = vsel %vm392, %v411, %v390
    %v417 = vld [vmem:[%s10] sm:$0xff]
    %v418 = vld [vmem:[%s10 + $0x8] sm:$0xff]
    %v419 = vld [vmem:[%s10 + $0x10] sm:$0xff]
    %v420 = vld [vmem:[%s10 + $0x18] sm:$0xff]
    %v421 = vld [vmem:[%s10 + $0x20] sm:$0xff]
    %v422 = vld [vmem:[%s10 + $0x28] sm:$0xff]
    %v423 = vld [vmem:[%s10 + $0x30] sm:$0xff]
    %v424 = vld [vmem:[%s10 + $0x38] sm:$0xff]
    %v426 = vsel %vm203, %v417, 0
    %v429 = vsel %vm203, %v418, 0
    %v432 = vsel %vm203, %v419, 0
    %v435 = vsel %vm203, %v420, 0
    %v438 = vsel %vm203, %v421, 0
    %v441 = vsel %vm203, %v422, 0
    %v444 = vsel %vm203, %v423, 0
    %v447 = vsel %vm203, %v424, 0
    %449 = vmatprep.subr.mxu0 0.0
    %450 = vmatpush1.msra.mxu0 0.0
    %451 = vmatprep.subr.mxu0 0.0
    %452 = vmatpush1.msra.mxu0 0.0
    %453 = vmatprep.subr.mxu0 0.0
    %454 = vmatpush1.msra.mxu0 0.0
    %455 = vmatprep.subr.mxu0 0.0
    %456 = vmatpush1.msra.mxu0 0.0
    %457 = vmatprep.subr.mxu0 0.0
    %458 = vmatpush1.msra.mxu0 0.0
    %459 = vmatprep.subr.mxu0 0.0
    %460 = vmatpush1.msra.mxu0 0.0
    %461 = vmatprep.subr.mxu0 0.0
    %462 = vmatpush1.msra.mxu0 0.0
    %463 = vmatprep.subr.mxu0 0.0
    %464 = vmatpush1.msra.mxu0 0.0
    %465 = vmatprep.subr.mxu0 0.0
    %466 = vmatpush1.msra.mxu0 0.0
    %467 = vmatprep.subr.mxu0 0.0
    %468 = vmatpush1.msra.mxu0 0.0
    %469 = vmatprep.subr.mxu0 0.0
    %470 = vmatpush1.msra.mxu0 0.0
    %471 = vmatprep.subr.mxu0 0.0
    %472 = vmatpush1.msra.mxu0 0.0
    %473 = vmatprep.subr.mxu0 0.0
    %474 = vmatpush1.msra.mxu0 %v416
    %475 = vmatprep.subr.mxu0 0.0
    %476 = vmatpush1.msra.mxu0 %v415
    %477 = vmatprep.subr.mxu0 0.0
    %478 = vmatpush1.msra.mxu0 %v414
    %479 = vmatprep.subr.mxu0 0.0
    %480 = vmatpush1.msra.mxu0 %v413
    %481 = vmatprep.subr.mxu0 0.0
    %482 = vmatpush2.msra.mxu0 0.0
    %483 = vmatprep.subr.mxu0 0.0
    %484 = vmatpush2.msra.mxu0 0.0
    %485 = vmatprep.subr.mxu0 0.0
    %486 = vmatpush2.msra.mxu0 0.0
    %487 = vmatprep.subr.mxu0 0.0
    %488 = vmatpush2.msra.mxu0 0.0
    %489 = vmatprep.subr.mxu0 0.0
    %490 = vmatpush2.msra.mxu0 0.0
    %491 = vmatprep.subr.mxu0 0.0
    %492 = vmatpush2.msra.mxu0 0.0
    %493 = vmatprep.subr.mxu0 0.0
    %494 = vmatpush2.msra.mxu0 0.0
    %495 = vmatprep.subr.mxu0 0.0
    %496 = vmatpush2.msra.mxu0 0.0
    %497 = vmatprep.subr.mxu0 0.0
    %498 = vmatpush2.msra.mxu0 0.0
    %499 = vmatprep.subr.mxu0 0.0
    %500 = vmatpush2.msra.mxu0 0.0
    %501 = vmatprep.subr.mxu0 0.0
    %502 = vmatpush2.msra.mxu0 0.0
    %503 = vmatprep.subr.mxu0 0.0
    %504 = vmatpush2.msra.mxu0 0.0
    %505 = vmatprep.subr.mxu0 0.0
    %506 = vmatpush2.msra.mxu0 0.0
    %507 = vmatprep.subr.mxu0 0.0
    %508 = vmatpush2.msra.mxu0 0.0
    %509 = vmatprep.subr.mxu0 0.0
    %510 = vmatpush2.msra.mxu0 0.0
    %511 = vmatprep.subr.mxu0 0.0
    %512 = vmatpush2.msra.mxu0 0.0
    %513 = vmatprep.mubr.f32.mxu0 0.0
    %514 = vmatmul.mubr.f32.gmra.mxu0 %v426
    %v515 = vpop.f32.mrf.mxu0
    %v516 = vadd.f32 0.0, %v515
    %v517 = vpop.f32.mrf.mxu0
    %518 = vmatprep.mubr.f32.mxu0 0.0
    %519 = vmatmul.mubr.f32.gmra.mxu0 %v429
    %v520 = vpop.f32.mrf.mxu0
    %v521 = vadd.f32 0.0, %v520
    %v522 = vpop.f32.mrf.mxu0
    %523 = vmatprep.mubr.f32.mxu0 0.0
    %524 = vmatmul.mubr.f32.gmra.mxu0 %v432
    %v525 = vpop.f32.mrf.mxu0
    %v526 = vadd.f32 0.0, %v525
    %v527 = vpop.f32.mrf.mxu0
    %528 = vmatprep.mubr.f32.mxu0 0.0
    %529 = vmatmul.mubr.f32.gmra.mxu0 %v435
    %v530 = vpop.f32.mrf.mxu0
    %v531 = vadd.f32 0.0, %v530
    %v532 = vpop.f32.mrf.mxu0
    %533 = vmatprep.mubr.f32.mxu0 0.0
    %534 = vmatmul.mubr.f32.gmra.mxu0 %v438
    %v535 = vpop.f32.mrf.mxu0
    %v536 = vadd.f32 0.0, %v535
    %v537 = vpop.f32.mrf.mxu0
    %538 = vmatprep.mubr.f32.mxu0 0.0
    %539 = vmatmul.mubr.f32.gmra.mxu0 %v441
    %v540 = vpop.f32.mrf.mxu0
    %v541 = vadd.f32 0.0, %v540
    %v542 = vpop.f32.mrf.mxu0
    %543 = vmatprep.mubr.f32.mxu0 0.0
    %544 = vmatmul.mubr.f32.gmra.mxu0 %v444
    %v545 = vpop.f32.mrf.mxu0
    %v546 = vadd.f32 0.0, %v545
    %v547 = vpop.f32.mrf.mxu0
    %548 = vmatprep.mubr.f32.mxu0 0.0
    %549 = vmatmul.mubr.f32.gmra.mxu0 %v447
    %v550 = vpop.f32.mrf.mxu0
    %v551 = vadd.f32 0.0, %v550
    %v552 = vpop.f32.mrf.mxu0
    %553 = vdwg.mxu0
    %vm554 = vcmask 523264
    %555 = vst.msk [vmem:[#allocation4] sm:$0xff] %vm554, %v516
    %556 = vst.msk [vmem:[#allocation4 + $0x8] sm:$0xff] %vm554, %v521
    %557 = vst.msk [vmem:[#allocation4 + $0x10] sm:$0xff] %vm554, %v526
    %558 = vst.msk [vmem:[#allocation4 + $0x18] sm:$0xff] %vm554, %v531
    %559 = vst.msk [vmem:[#allocation5] sm:$0xff] %vm554, %v536
    %560 = vst.msk [vmem:[#allocation5 + $0x8] sm:$0xff] %vm554, %v541
    %561 = vst.msk [vmem:[#allocation5 + $0x10] sm:$0xff] %vm554, %v546
    %562 = vst.msk [vmem:[#allocation5 + $0x18] sm:$0xff] %vm554, %v551
    %v563 = vld [vmem:[%s11] sm:$0xff]
    %v564 = vld [vmem:[%s11 + $0x8] sm:$0xff]
    %v565 = vld [vmem:[%s11 + $0x10] sm:$0xff]
    %v566 = vld [vmem:[%s11 + $0x18] sm:$0xff]
    %v567 = vld [vmem:[%s12] sm:$0xff]
    %v568 = vld [vmem:[%s12 + $0x8] sm:$0xff]
    %v569 = vld [vmem:[%s12 + $0x10] sm:$0xff]
    %v570 = vld [vmem:[%s12 + $0x18] sm:$0xff]
    %v571 = vld [vmem:[%s13] sm:$0x1]
    %v572 = vld [vmem:[%s14] sm:$0xff]
    %v573 = vld [vmem:[%s14 + $0x8] sm:$0xff]
    %v574 = vld [vmem:[%s14 + $0x10] sm:$0xff]
    %v575 = vld [vmem:[%s14 + $0x18] sm:$0xff]
    %v576 = vld [vmem:[%s16] sm:$0xff]
    %v577 = vld [vmem:[%s16 + $0x8] sm:$0xff]
    %v578 = vld [vmem:[%s16 + $0x10] sm:$0xff]
    %v579 = vld [vmem:[%s16 + $0x18] sm:$0xff]
    %v580 = vld [vmem:[%s15] sm:$0x1]
    %v581 = vld [vmem:[%s17] sm:$0x1]
    %v582 = vld [vmem:[%s18] sm:$0xff]
    %v583 = vld [vmem:[%s18 + $0x8] sm:$0xff]
    %v584 = vld [vmem:[%s18 + $0x10] sm:$0xff]
    %v585 = vld [vmem:[%s18 + $0x18] sm:$0xff]
    %v586 = vld [vmem:[#allocation13] sm:$0x1]
    %v587 = vld [vmem:[%s2] sm:$0x1]
    %v588 = vld [vmem:[%s21] sm:$0x1]
    %vm589 = vcmask 253952
    %590 = vst.msk [vmem:[#allocation6] sm:$0x1] %vm589, %v588
    %v591 = vld [vmem:[%s22] sm:$0x1]
    %592 = vst.msk [vmem:[#allocation7] sm:$0x1] %vm589, %v591
    %v593 = vld [vmem:[%s20] sm:$0x1]
    %594 = vst.msk [vmem:[#allocation8] sm:$0x1] %vm589, %v593
    %vm595 = vcmask 516096
    %596 = vst.msk [vmem:[#allocation9] sm:$0x1] %vm595, 0.0
    // While loop
    $region98: #{tpu_custom_call.1} parent=1 // loop_pre_header
      _
    $region99: #{tpu_custom_call.1} parent=1 // loop_header
      %s598 = sphi 0, %s1178
      %s599 = sphi 0, %s1174
      %s600 = sphi 4294967295, %s1176
      %s601 = sphi 0, %s1177
      %p602 = scmp.lt.s32.totalorder %s598, 128
      %p603 = scmp.eq.s32.totalorder %s601, 0
      %p604 = pnand %p602, %p603
      %p605 = pneg %p604
    $region100: #{tpu_custom_call.1} parent=1 // loop_header_branch
      %607 = sbr.rel (%p604) target = $region104
    $region101: #{tpu_custom_call.1} parent=1 // loop_body
      %v608 = vld [vmem:[#allocation8] sm:$0x1]
      %v609 = vld [vmem:[#allocation6] sm:$0x1]
      %v610 = vld [vmem:[#allocation7] sm:$0x1]
      %v612 = vsel %vm203, %v609, 0
      %614 = vmatprep.subr.mxu0 0.0
      %615 = vmatpush1.msra.mxu0 0.0
      %616 = vmatprep.subr.mxu0 0.0
      %617 = vmatpush1.msra.mxu0 0.0
      %618 = vmatprep.subr.mxu0 0.0
      %619 = vmatpush1.msra.mxu0 0.0
      %620 = vmatprep.subr.mxu0 0.0
      %621 = vmatpush1.msra.mxu0 0.0
      %622 = vmatprep.subr.mxu0 0.0
      %623 = vmatpush1.msra.mxu0 0.0
      %624 = vmatprep.subr.mxu0 0.0
      %625 = vmatpush1.msra.mxu0 0.0
      %626 = vmatprep.subr.mxu0 0.0
      %627 = vmatpush1.msra.mxu0 0.0
      %628 = vmatprep.subr.mxu0 0.0
      %629 = vmatpush1.msra.mxu0 0.0
      %630 = vmatprep.subr.mxu0 0.0
      %631 = vmatpush1.msra.mxu0 0.0
      %632 = vmatprep.subr.mxu0 0.0
      %633 = vmatpush1.msra.mxu0 0.0
      %634 = vmatprep.subr.mxu0 0.0
      %635 = vmatpush1.msra.mxu0 0.0
      %636 = vmatprep.subr.mxu0 0.0
      %637 = vmatpush1.msra.mxu0 0.0
      %638 = vmatprep.subr.mxu0 0.0
      %639 = vmatpush1.msra.mxu0 %v570
      %640 = vmatprep.subr.mxu0 0.0
      %641 = vmatpush1.msra.mxu0 %v569
      %642 = vmatprep.subr.mxu0 0.0
      %643 = vmatpush1.msra.mxu0 %v568
      %644 = vmatprep.subr.mxu0 0.0
      %645 = vmatpush1.msra.mxu0 %v567
      %646 = vmatprep.subr.mxu0 0.0
      %647 = vmatpush2.msra.mxu0 0.0
      %648 = vmatprep.subr.mxu0 0.0
      %649 = vmatpush2.msra.mxu0 0.0
      %650 = vmatprep.subr.mxu0 0.0
      %651 = vmatpush2.msra.mxu0 0.0
      %652 = vmatprep.subr.mxu0 0.0
      %653 = vmatpush2.msra.mxu0 0.0
      %654 = vmatprep.subr.mxu0 0.0
      %655 = vmatpush2.msra.mxu0 0.0
      %656 = vmatprep.subr.mxu0 0.0
      %657 = vmatpush2.msra.mxu0 0.0
      %658 = vmatprep.subr.mxu0 0.0
      %659 = vmatpush2.msra.mxu0 0.0
      %660 = vmatprep.subr.mxu0 0.0
      %661 = vmatpush2.msra.mxu0 0.0
      %662 = vmatprep.subr.mxu0 0.0
      %663 = vmatpush2.msra.mxu0 0.0
      %664 = vmatprep.subr.mxu0 0.0
      %665 = vmatpush2.msra.mxu0 0.0
      %666 = vmatprep.subr.mxu0 0.0
      %667 = vmatpush2.msra.mxu0 0.0
      %668 = vmatprep.subr.mxu0 0.0
      %669 = vmatpush2.msra.mxu0 0.0
      %670 = vmatprep.subr.mxu0 0.0
      %671 = vmatpush2.msra.mxu0 0.0
      %672 = vmatprep.subr.mxu0 0.0
      %673 = vmatpush2.msra.mxu0 0.0
      %674 = vmatprep.subr.mxu0 0.0
      %675 = vmatpush2.msra.mxu0 0.0
      %676 = vmatprep.subr.mxu0 0.0
      %677 = vmatpush2.msra.mxu0 0.0
      %678 = vmatprep.mubr.f32.mxu0 0.0
      %679 = vmatmul.mubr.f32.gmra.mxu0 %v612
      %v680 = vpop.f32.mrf.mxu0
      %v681 = vadd.f32 0.0, %v680
      %v682 = vpop.f32.mrf.mxu0
      %683 = vdwg.mxu0
      %v685 = vsel %vm203, %v608, 0
      %687 = vmatprep.subr.mxu0 0.0
      %688 = vmatpush1.msra.mxu0 0.0
      %689 = vmatprep.subr.mxu0 0.0
      %690 = vmatpush1.msra.mxu0 0.0
      %691 = vmatprep.subr.mxu0 0.0
      %692 = vmatpush1.msra.mxu0 0.0
      %693 = vmatprep.subr.mxu0 0.0
      %694 = vmatpush1.msra.mxu0 0.0
      %695 = vmatprep.subr.mxu0 0.0
      %696 = vmatpush1.msra.mxu0 0.0
      %697 = vmatprep.subr.mxu0 0.0
      %698 = vmatpush1.msra.mxu0 0.0
      %699 = vmatprep.subr.mxu0 0.0
      %700 = vmatpush1.msra.mxu0 0.0
      %701 = vmatprep.subr.mxu0 0.0
      %702 = vmatpush1.msra.mxu0 0.0
      %703 = vmatprep.subr.mxu0 0.0
      %704 = vmatpush1.msra.mxu0 0.0
      %705 = vmatprep.subr.mxu0 0.0
      %706 = vmatpush1.msra.mxu0 0.0
      %707 = vmatprep.subr.mxu0 0.0
      %708 = vmatpush1.msra.mxu0 0.0
      %709 = vmatprep.subr.mxu0 0.0
      %710 = vmatpush1.msra.mxu0 0.0
      %711 = vmatprep.subr.mxu0 0.0
      %712 = vmatpush1.msra.mxu0 %v566
      %713 = vmatprep.subr.mxu0 0.0
      %714 = vmatpush1.msra.mxu0 %v565
      %715 = vmatprep.subr.mxu0 0.0
      %716 = vmatpush1.msra.mxu0 %v564
      %717 = vmatprep.subr.mxu0 0.0
      %718 = vmatpush1.msra.mxu0 %v563
      %719 = vmatprep.subr.mxu0 0.0
      %720 = vmatpush2.msra.mxu0 0.0
      %721 = vmatprep.subr.mxu0 0.0
      %722 = vmatpush2.msra.mxu0 0.0
      %723 = vmatprep.subr.mxu0 0.0
      %724 = vmatpush2.msra.mxu0 0.0
      %725 = vmatprep.subr.mxu0 0.0
      %726 = vmatpush2.msra.mxu0 0.0
      %727 = vmatprep.subr.mxu0 0.0
      %728 = vmatpush2.msra.mxu0 0.0
      %729 = vmatprep.subr.mxu0 0.0
      %730 = vmatpush2.msra.mxu0 0.0
      %731 = vmatprep.subr.mxu0 0.0
      %732 = vmatpush2.msra.mxu0 0.0
      %733 = vmatprep.subr.mxu0 0.0
      %734 = vmatpush2.msra.mxu0 0.0
      %735 = vmatprep.subr.mxu0 0.0
      %736 = vmatpush2.msra.mxu0 0.0
      %737 = vmatprep.subr.mxu0 0.0
      %738 = vmatpush2.msra.mxu0 0.0
      %739 = vmatprep.subr.mxu0 0.0
      %740 = vmatpush2.msra.mxu0 0.0
      %741 = vmatprep.subr.mxu0 0.0
      %742 = vmatpush2.msra.mxu0 0.0
      %743 = vmatprep.subr.mxu0 0.0
      %744 = vmatpush2.msra.mxu0 0.0
      %745 = vmatprep.subr.mxu0 0.0
      %746 = vmatpush2.msra.mxu0 0.0
      %747 = vmatprep.subr.mxu0 0.0
      %748 = vmatpush2.msra.mxu0 0.0
      %749 = vmatprep.subr.mxu0 0.0
      %750 = vmatpush2.msra.mxu0 0.0
      %751 = vmatprep.mubr.f32.mxu0 0.0
      %752 = vmatmul.mubr.f32.gmra.mxu0 %v685
      %v753 = vpop.f32.mrf.mxu0
      %v754 = vadd.f32 %v681, %v753
      %v755 = vpop.f32.mrf.mxu0
      %756 = vdwg.mxu0
      %v757 = vadd.f32 %v754, %v571
      %v758 = vxor.u32 %v757, 2147483648
      %v759 = vmul.f32 %v758, 1.442695
      %v760 = vpow.pop %v759
      %v761 = vadd.f32 %v760, 1.0
      %v762 = vrcp.pop %v761
      %v763 = vmul.f32 1.0, %v762
      %v764 = vtanh.pop %v757
      %v766 = vlaneseq
      %v767 = vshrl.u32 %v766, 7
      %v768 = vsub.s32 0, %v767
      %v769 = vrot.slane %v610, %v768
      %770 = vrot.lane.b32.xlu0 %v769, 32
      %v771 = vpop.permute.xlu0 %770
      %v773 = vmul.f32 %v763, %v771
      %775 = vrot.lane.b32.xlu0 %v764, 64
      %v776 = vpop.permute.xlu0 %775
      %v778 = vmul.f32 %v763, %v776
      %780 = vrot.lane.b32.xlu0 %v778, 32
      %v781 = vpop.permute.xlu0 %780
      %v783 = vadd.f32 %v773, %v781
      %v784 = vtanh.pop %v783
      %786 = vrot.lane.b32.xlu0 %v784, 64
      %v787 = vpop.permute.xlu0 %786
      %v789 = vmul.f32 %v763, %v787
      %791 = vrot.lane.b32.xlu0 %v789, 32
      %v792 = vpop.permute.xlu0 %791
      %794 = vst.msk [vmem:[#allocation6] sm:$0x1] %vm589, %v792
      %796 = vrot.lane.b32.xlu0 %v783, 96
      %v797 = vpop.permute.xlu0 %796
      %799 = vst.msk [vmem:[#allocation7] sm:$0x1] %vm589, %v797
      %v800 = vld [vmem:[#allocation5] sm:$0xff]
      %v801 = vld [vmem:[#allocation5 + $0x8] sm:$0xff]
      %v802 = vld [vmem:[#allocation5 + $0x10] sm:$0xff]
      %v803 = vld [vmem:[#allocation5 + $0x18] sm:$0xff]
      %v804 = vld [vmem:[#allocation3] sm:$0xff]
      %v805 = vld [vmem:[#allocation3 + $0x8] sm:$0xff]
      %v806 = vld [vmem:[#allocation3 + $0x10] sm:$0xff]
      %v807 = vld [vmem:[#allocation3 + $0x18] sm:$0xff]
      %v808 = vld [vmem:[#allocation3 + $0x20] sm:$0xff]
      %v809 = vld [vmem:[#allocation3 + $0x28] sm:$0xff]
      %v810 = vld [vmem:[#allocation3 + $0x30] sm:$0xff]
      %v811 = vld [vmem:[#allocation3 + $0x38] sm:$0xff]
      %v812 = vlaneseq
      %v813 = vshrl.u32 %v812, 7
      %v814 = vsub.s32 0, %v813
      %v815 = vrot.slane %v789, %v814
      %817 = vrot.lane.b32.xlu0 %v815, 32
      %v818 = vpop.permute.xlu0 %817
      %v820 = vmul.f32 %v572, %v818
      %v821 = vmul.f32 %v573, %v818
      %v822 = vmul.f32 %v574, %v818
      %v823 = vmul.f32 %v575, %v818
      %v824 = vsel %vm203, %v820, 0.0
      %825 = vadd.xlane.f32.xlu0 %v824
      %v826 = vpop.xlane.xlu0 %825
      %v827 = vsel %vm203, %v821, 0.0
      %828 = vadd.xlane.f32.xlu0 %v827
      %v829 = vpop.xlane.xlu0 %828
      %v830 = vsel %vm203, %v822, 0.0
      %831 = vadd.xlane.f32.xlu0 %v830
      %v832 = vpop.xlane.xlu0 %831
      %v833 = vsel %vm203, %v823, 0.0
      %834 = vadd.xlane.f32.xlu0 %v833
      %v835 = vpop.xlane.xlu0 %834
      %v836 = vadd.f32 %v800, %v826
      %v837 = vadd.f32 %v801, %v829
      %v838 = vadd.f32 %v802, %v832
      %v839 = vadd.f32 %v803, %v835
      %v840 = vtanh.pop %v836
      %v841 = vtanh.pop %v837
      %v842 = vtanh.pop %v838
      %v843 = vtanh.pop %v839
      %v845 = vsel %vm203, %v580, 0
      %847 = vmatprep.subr.mxu0 0.0
      %848 = vmatpush1.msra.mxu0 0.0
      %849 = vmatprep.subr.mxu0 0.0
      %850 = vmatpush1.msra.mxu0 0.0
      %851 = vmatprep.subr.mxu0 0.0
      %852 = vmatpush1.msra.mxu0 0.0
      %853 = vmatprep.subr.mxu0 0.0
      %854 = vmatpush1.msra.mxu0 0.0
      %855 = vmatprep.subr.mxu0 0.0
      %856 = vmatpush1.msra.mxu0 0.0
      %857 = vmatprep.subr.mxu0 0.0
      %858 = vmatpush1.msra.mxu0 0.0
      %859 = vmatprep.subr.mxu0 0.0
      %860 = vmatpush1.msra.mxu0 0.0
      %861 = vmatprep.subr.mxu0 0.0
      %862 = vmatpush1.msra.mxu0 0.0
      %863 = vmatprep.subr.mxu0 0.0
      %864 = vmatpush1.msra.mxu0 0.0
      %865 = vmatprep.subr.mxu0 0.0
      %866 = vmatpush1.msra.mxu0 0.0
      %867 = vmatprep.subr.mxu0 0.0
      %868 = vmatpush1.msra.mxu0 0.0
      %869 = vmatprep.subr.mxu0 0.0
      %870 = vmatpush1.msra.mxu0 0.0
      %871 = vmatprep.subr.mxu0 0.0
      %872 = vmatpush1.msra.mxu0 %v843
      %873 = vmatprep.subr.mxu0 0.0
      %874 = vmatpush1.msra.mxu0 %v842
      %875 = vmatprep.subr.mxu0 0.0
      %876 = vmatpush1.msra.mxu0 %v841
      %877 = vmatprep.subr.mxu0 0.0
      %878 = vmatpush1.msra.mxu0 %v840
      %879 = vmatprep.subr.mxu0 0.0
      %880 = vmatpush2.msra.mxu0 0.0
      %881 = vmatprep.subr.mxu0 0.0
      %882 = vmatpush2.msra.mxu0 0.0
      %883 = vmatprep.subr.mxu0 0.0
      %884 = vmatpush2.msra.mxu0 0.0
      %885 = vmatprep.subr.mxu0 0.0
      %886 = vmatpush2.msra.mxu0 0.0
      %887 = vmatprep.subr.mxu0 0.0
      %888 = vmatpush2.msra.mxu0 0.0
      %889 = vmatprep.subr.mxu0 0.0
      %890 = vmatpush2.msra.mxu0 0.0
      %891 = vmatprep.subr.mxu0 0.0
      %892 = vmatpush2.msra.mxu0 0.0
      %893 = vmatprep.subr.mxu0 0.0
      %894 = vmatpush2.msra.mxu0 0.0
      %895 = vmatprep.subr.mxu0 0.0
      %896 = vmatpush2.msra.mxu0 0.0
      %897 = vmatprep.subr.mxu0 0.0
      %898 = vmatpush2.msra.mxu0 0.0
      %899 = vmatprep.subr.mxu0 0.0
      %900 = vmatpush2.msra.mxu0 0.0
      %901 = vmatprep.subr.mxu0 0.0
      %902 = vmatpush2.msra.mxu0 0.0
      %903 = vmatprep.subr.mxu0 0.0
      %904 = vmatpush2.msra.mxu0 0.0
      %905 = vmatprep.subr.mxu0 0.0
      %906 = vmatpush2.msra.mxu0 0.0
      %907 = vmatprep.subr.mxu0 0.0
      %908 = vmatpush2.msra.mxu0 0.0
      %909 = vmatprep.subr.mxu0 0.0
      %910 = vmatpush2.msra.mxu0 0.0
      %911 = vmatprep.mubr.f32.mxu0 0.0
      %912 = vmatmul.mubr.f32.gmra.mxu0 %v845
      %v913 = vpop.f32.mrf.mxu0
      %v914 = vadd.f32 0.0, %v913
      %v915 = vpop.f32.mrf.mxu0
      %916 = vdwg.mxu0
      %v917 = vsel %vm102, %v914, -1e+30
      %v918 = vsel %vm595, %v917, -inf
      %919 = vmax.xlane.f32.xlu0 %v918
      %v920 = vpop.xlane.xlu0 %919
      %v921 = vsub.f32 %v917, %v920
      %v922 = vmul.f32 %v921, 1.442695
      %v923 = vpow.pop %v922
      %v924 = vsel %vm102, %v923, 0.0
      %v925 = vsel %vm595, %v924, 0.0
      %926 = vadd.xlane.f32.xlu0 %v925
      %v927 = vpop.xlane.xlu0 %926
      %v928 = vrcp.pop %v927
      %v929 = vmul.f32 %v924, %v928
      %v931 = vsel %vm554, %v929, 0
      %933 = vmatprep.subr.mxu0 0.0
      %934 = vmatpush1.msra.mxu0 0.0
      %935 = vmatprep.subr.mxu0 0.0
      %936 = vmatpush1.msra.mxu0 0.0
      %937 = vmatprep.subr.mxu0 0.0
      %938 = vmatpush1.msra.mxu0 0.0
      %939 = vmatprep.subr.mxu0 0.0
      %940 = vmatpush1.msra.mxu0 0.0
      %941 = vmatprep.subr.mxu0 0.0
      %942 = vmatpush1.msra.mxu0 0.0
      %943 = vmatprep.subr.mxu0 0.0
      %944 = vmatpush1.msra.mxu0 0.0
      %945 = vmatprep.subr.mxu0 0.0
      %946 = vmatpush1.msra.mxu0 0.0
      %947 = vmatprep.subr.mxu0 0.0
      %948 = vmatpush1.msra.mxu0 0.0
      %949 = vmatprep.subr.mxu0 0.0
      %950 = vmatpush1.msra.mxu0 %v811
      %951 = vmatprep.subr.mxu0 0.0
      %952 = vmatpush1.msra.mxu0 %v810
      %953 = vmatprep.subr.mxu0 0.0
      %954 = vmatpush1.msra.mxu0 %v809
      %955 = vmatprep.subr.mxu0 0.0
      %956 = vmatpush1.msra.mxu0 %v808
      %957 = vmatprep.subr.mxu0 0.0
      %958 = vmatpush1.msra.mxu0 %v807
      %959 = vmatprep.subr.mxu0 0.0
      %960 = vmatpush1.msra.mxu0 %v806
      %961 = vmatprep.subr.mxu0 0.0
      %962 = vmatpush1.msra.mxu0 %v805
      %963 = vmatprep.subr.mxu0 0.0
      %964 = vmatpush1.msra.mxu0 %v804
      %965 = vmatprep.subr.mxu0 0.0
      %966 = vmatpush2.msra.mxu0 0.0
      %967 = vmatprep.subr.mxu0 0.0
      %968 = vmatpush2.msra.mxu0 0.0
      %969 = vmatprep.subr.mxu0 0.0
      %970 = vmatpush2.msra.mxu0 0.0
      %971 = vmatprep.subr.mxu0 0.0
      %972 = vmatpush2.msra.mxu0 0.0
      %973 = vmatprep.subr.mxu0 0.0
      %974 = vmatpush2.msra.mxu0 0.0
      %975 = vmatprep.subr.mxu0 0.0
      %976 = vmatpush2.msra.mxu0 0.0
      %977 = vmatprep.subr.mxu0 0.0
      %978 = vmatpush2.msra.mxu0 0.0
      %979 = vmatprep.subr.mxu0 0.0
      %980 = vmatpush2.msra.mxu0 0.0
      %981 = vmatprep.subr.mxu0 0.0
      %982 = vmatpush2.msra.mxu0 0.0
      %983 = vmatprep.subr.mxu0 0.0
      %984 = vmatpush2.msra.mxu0 0.0
      %985 = vmatprep.subr.mxu0 0.0
      %986 = vmatpush2.msra.mxu0 0.0
      %987 = vmatprep.subr.mxu0 0.0
      %988 = vmatpush2.msra.mxu0 0.0
      %989 = vmatprep.subr.mxu0 0.0
      %990 = vmatpush2.msra.mxu0 0.0
      %991 = vmatprep.subr.mxu0 0.0
      %992 = vmatpush2.msra.mxu0 0.0
      %993 = vmatprep.subr.mxu0 0.0
      %994 = vmatpush2.msra.mxu0 0.0
      %995 = vmatprep.subr.mxu0 0.0
      %996 = vmatpush2.msra.mxu0 0.0
      %997 = vmatprep.mubr.f32.mxu0 0.0
      %998 = vmatmul.mubr.f32.gmra.mxu0 %v931
      %v999 = vpop.f32.mrf.mxu0
      %v1000 = vadd.f32 0.0, %v999
      %v1001 = vpop.f32.mrf.mxu0
      %1002 = vdwg.mxu0
      %v1003 = vld [vmem:[#allocation4] sm:$0xff]
      %v1004 = vld [vmem:[#allocation4 + $0x8] sm:$0xff]
      %v1005 = vld [vmem:[#allocation4 + $0x10] sm:$0xff]
      %v1006 = vld [vmem:[#allocation4 + $0x18] sm:$0xff]
      %v1007 = vlaneseq
      %v1008 = vshrl.u32 %v1007, 7
      %v1009 = vsub.s32 0, %v1008
      %v1010 = vrot.slane %v1000, %v1009
      %v1011 = vmul.f32 %v576, %v1010
      %v1012 = vmul.f32 %v577, %v1010
      %v1013 = vmul.f32 %v578, %v1010
      %v1014 = vmul.f32 %v579, %v1010
      %v1015 = vsel %vm203, %v1011, 0.0
      %1016 = vadd.xlane.f32.xlu0 %v1015
      %v1017 = vpop.xlane.xlu0 %1016
      %v1018 = vsel %vm203, %v1012, 0.0
      %1019 = vadd.xlane.f32.xlu0 %v1018
      %v1020 = vpop.xlane.xlu0 %1019
      %v1021 = vsel %vm203, %v1013, 0.0
      %1022 = vadd.xlane.f32.xlu0 %v1021
      %v1023 = vpop.xlane.xlu0 %1022
      %v1024 = vsel %vm203, %v1014, 0.0
      %1025 = vadd.xlane.f32.xlu0 %v1024
      %v1026 = vpop.xlane.xlu0 %1025
      %v1027 = vadd.f32 %v1003, %v1017
      %v1028 = vadd.f32 %v1004, %v1020
      %v1029 = vadd.f32 %v1005, %v1023
      %v1030 = vadd.f32 %v1006, %v1026
      %v1031 = vtanh.pop %v1027
      %v1032 = vtanh.pop %v1028
      %v1033 = vtanh.pop %v1029
      %v1034 = vtanh.pop %v1030
      %v1036 = vsel %vm203, %v581, 0
      %1038 = vmatprep.subr.mxu0 0.0
      %1039 = vmatpush1.msra.mxu0 0.0
      %1040 = vmatprep.subr.mxu0 0.0
      %1041 = vmatpush1.msra.mxu0 0.0
      %1042 = vmatprep.subr.mxu0 0.0
      %1043 = vmatpush1.msra.mxu0 0.0
      %1044 = vmatprep.subr.mxu0 0.0
      %1045 = vmatpush1.msra.mxu0 0.0
      %1046 = vmatprep.subr.mxu0 0.0
      %1047 = vmatpush1.msra.mxu0 0.0
      %1048 = vmatprep.subr.mxu0 0.0
      %1049 = vmatpush1.msra.mxu0 0.0
      %1050 = vmatprep.subr.mxu0 0.0
      %1051 = vmatpush1.msra.mxu0 0.0
      %1052 = vmatprep.subr.mxu0 0.0
      %1053 = vmatpush1.msra.mxu0 0.0
      %1054 = vmatprep.subr.mxu0 0.0
      %1055 = vmatpush1.msra.mxu0 0.0
      %1056 = vmatprep.subr.mxu0 0.0
      %1057 = vmatpush1.msra.mxu0 0.0
      %1058 = vmatprep.subr.mxu0 0.0
      %1059 = vmatpush1.msra.mxu0 0.0
      %1060 = vmatprep.subr.mxu0 0.0
      %1061 = vmatpush1.msra.mxu0 0.0
      %1062 = vmatprep.subr.mxu0 0.0
      %1063 = vmatpush1.msra.mxu0 %v1034
      %1064 = vmatprep.subr.mxu0 0.0
      %1065 = vmatpush1.msra.mxu0 %v1033
      %1066 = vmatprep.subr.mxu0 0.0
      %1067 = vmatpush1.msra.mxu0 %v1032
      %1068 = vmatprep.subr.mxu0 0.0
      %1069 = vmatpush1.msra.mxu0 %v1031
      %1070 = vmatprep.subr.mxu0 0.0
      %1071 = vmatpush2.msra.mxu0 0.0
      %1072 = vmatprep.subr.mxu0 0.0
      %1073 = vmatpush2.msra.mxu0 0.0
      %1074 = vmatprep.subr.mxu0 0.0
      %1075 = vmatpush2.msra.mxu0 0.0
      %1076 = vmatprep.subr.mxu0 0.0
      %1077 = vmatpush2.msra.mxu0 0.0
      %1078 = vmatprep.subr.mxu0 0.0
      %1079 = vmatpush2.msra.mxu0 0.0
      %1080 = vmatprep.subr.mxu0 0.0
      %1081 = vmatpush2.msra.mxu0 0.0
      %1082 = vmatprep.subr.mxu0 0.0
      %1083 = vmatpush2.msra.mxu0 0.0
      %1084 = vmatprep.subr.mxu0 0.0
      %1085 = vmatpush2.msra.mxu0 0.0
      %1086 = vmatprep.subr.mxu0 0.0
      %1087 = vmatpush2.msra.mxu0 0.0
      %1088 = vmatprep.subr.mxu0 0.0
      %1089 = vmatpush2.msra.mxu0 0.0
      %1090 = vmatprep.subr.mxu0 0.0
      %1091 = vmatpush2.msra.mxu0 0.0
      %1092 = vmatprep.subr.mxu0 0.0
      %1093 = vmatpush2.msra.mxu0 0.0
      %1094 = vmatprep.subr.mxu0 0.0
      %1095 = vmatpush2.msra.mxu0 0.0
      %1096 = vmatprep.subr.mxu0 0.0
      %1097 = vmatpush2.msra.mxu0 0.0
      %1098 = vmatprep.subr.mxu0 0.0
      %1099 = vmatpush2.msra.mxu0 0.0
      %1100 = vmatprep.subr.mxu0 0.0
      %1101 = vmatpush2.msra.mxu0 0.0
      %1102 = vmatprep.mubr.f32.mxu0 0.0
      %1103 = vmatmul.mubr.f32.gmra.mxu0 %v1036
      %v1104 = vpop.f32.mrf.mxu0
      %v1105 = vadd.f32 0.0, %v1104
      %v1106 = vpop.f32.mrf.mxu0
      %1107 = vdwg.mxu0
      %v1108 = vld [vmem:[#allocation9] sm:$0x1]
      %vm1109 = vcmp.gt.f32.partialorder %v1108, 0.5
      %v1110 = vsel %vm1109, -1e+18, %v1105
      %v1111 = vstv %s600
      %v1112 = vsub.s32 %v587, %v1111
      %vm1113 = vcmp.lt.s32.totalorder %v1112, 0
      %v1114 = vsub.s32 0, %v1112
      %v1115 = vsel %vm1113, %v1114, %v1112
      %vm1116 = vcmp.gt.s32.totalorder %v1115, 1000
      %vm1117 = vmand %vm1116, %vm104
      %p1118 = scmp.eq.s32.totalorder %s599, 1
      %s1119 = scalar_select %p1118, 1, 0
      %v1120 = vstv %s1119
      %vm1121 = vcmp.eq.s32.totalorder %v1120, 1
      %vm1122 = vmand %vm1121, %vm1117
      %v1123 = vsel %vm1122, -1e+18, %v1110
      %p1124 = scmp.gt.s32.totalorder %s598, 100
      %s1125 = scalar_select %p1124, 1, 0
      %v1126 = vstv %s1125
      %vm1127 = vcmp.eq.s32.totalorder %v1126, 1
      %vm1128 = vmand %vm1127, %vm105
      %v1129 = vsel %vm1128, -1e+18, %v1123
      %p1130 = scmp.gt.s32.totalorder %s598, 110
      %s1131 = scalar_select %p1130, 1, 0
      %v1132 = vstv %s1131
      %vm1133 = vcmp.eq.s32.totalorder %v1132, 1
      %vm1134 = vmand %vm1133, %vm107
      %v1135 = vsel %vm1134, 1e+08, %v1129
      %v1136 = vsel %vm102, %v1135, -1e+30
      %v1137 = vsel %vm595, %v1136, -inf
      %1138 = vmax.xlane.f32.xlu0 %v1137
      %v1139 = vpop.xlane.xlu0 %1138
      %vm1140 = vcmp.ge.f32.partialorder %v1136, %v1139
      %v1141 = vsel %vm1140, %v99, 1e+09
      %v1142 = vsel %vm595, %v1141, inf
      %1143 = vmin.xlane.f32.xlu0 %v1142
      %v1144 = vpop.xlane.xlu0 %1143
      %v1145 = vcvt.f32.s32.to.zero.pseudo %v1144
      %vm1146 = vcmask 0
      %1147 = vst.msk [vmem:[#allocation10] sm:$0x1] %vm1146, %v1145
      %v1148 = vld [vmem:[#allocation10] sm:$0x1]
      %s1149 = vtos %v1148
      %s1150 = scalar_lea.smem [#allocation17], %s598
      %1151 = sst [smem:[%s1150]] %s1149
      %v1152 = vstv %s1149
      %vm1153 = vcmp.eq.s32.totalorder %v98, %v1152
      %p1154 = scmp.ne.s32.totalorder %s1149, %s95
      %s1155 = scalar_select %p1154, 1, 0
      %v1156 = vstv %s1155
      %vm1157 = vcmp.eq.s32.totalorder %v1156, 1
      %vm1158 = vmand %vm1153, %vm1157
      %v1159 = vld [vmem:[#allocation9] sm:$0x1]
      %v1160 = vsel %vm1158, 1.0, %v1159
      %1161 = vst.msk [vmem:[#allocation9] sm:$0x1] %vm595, %v1160
      %s1162 = scalar_lea.vmem [#allocation2], %s1149
      %v1163 = vld [vmem:[%s1162] sm:$0x1]
      %1164 = vst.msk [vmem:[#allocation8] sm:$0x1] %vm589, %v1163
      %p1165 = scmp.eq.s32.totalorder %s1149, %s95
      %p1166 = scmp.eq.s32.totalorder %s1149, %s96
      %p1167 = scmp.eq.s32.totalorder %s599, 0
      %p1168 = scmp.ne.s32.totalorder %s1149, %s96
      %p1169 = pnand %p1167, %p1168
      %p1170 = pneg %p1169
      %p1171 = pnand %p1154, %p1170
      %p1172 = pneg %p1171
      %s1173 = scalar_select %p1172, 1, %s599
      %s1174 = scalar_select %p1165, 0, %s1173
      %s1175 = sld [smem:[#allocation14 + %s1149]]
      %s1176 = scalar_select %p1172, %s1175, %s600
      %s1177 = scalar_select %p1166, 1, %s601
      %s1178 = sadd.s32 %s598, 1
    $region102: #{tpu_custom_call.1} parent=1 // loop_footer
      _
    $region103: #{tpu_custom_call.1} parent=1 // loop_footer_branch
      %597 = sbr.rel target = $region99
    $region104: #{tpu_custom_call.1} parent=1 // loop_exit
      _
    %s1179 = scalar_lea.smem [#allocation18], 0
    %1180 = sst [smem:[%s1179]] %s598
    %v1181 = vld [vmem:[%s21] sm:$0x1]
    %1182 = vst.msk [vmem:[#allocation6] sm:$0x1] %vm589, %v1181
    %v1183 = vld [vmem:[%s22] sm:$0x1]
    %1184 = vst.msk [vmem:[#allocation7] sm:$0x1] %vm589, %v1183
    %v1185 = vld [vmem:[%s20] sm:$0x1]
    %1186 = vst.msk [vmem:[#allocation8] sm:$0x1] %vm589, %v1185
    // While loop
    $region105: #{tpu_custom_call.1} parent=1 // loop_pre_header
      _
    $region106: #{tpu_custom_call.1} parent=1 // loop_header
      %s1188 = sphi 0, %s1190
      %p1189 = scmp.ge.s32.totalorder %s1188, %s598
    $region107: #{tpu_custom_call.1} parent=1 // loop_header_branch
      %1192 = sbr.rel (%p1189) target = $region111
    $region108: #{tpu_custom_call.1} parent=1 // loop_body
      %v1193 = vld [vmem:[#allocation8] sm:$0x1]
      %v1194 = vld [vmem:[#allocation6] sm:$0x1]
      %v1195 = vld [vmem:[#allocation7] sm:$0x1]
      %v1197 = vsel %vm203, %v1194, 0
      %1199 = vmatprep.subr.mxu0 0.0
      %1200 = vmatpush1.msra.mxu0 0.0
      %1201 = vmatprep.subr.mxu0 0.0
      %1202 = vmatpush1.msra.mxu0 0.0
      %1203 = vmatprep.subr.mxu0 0.0
      %1204 = vmatpush1.msra.mxu0 0.0
      %1205 = vmatprep.subr.mxu0 0.0
      %1206 = vmatpush1.msra.mxu0 0.0
      %1207 = vmatprep.subr.mxu0 0.0
      %1208 = vmatpush1.msra.mxu0 0.0
      %1209 = vmatprep.subr.mxu0 0.0
      %1210 = vmatpush1.msra.mxu0 0.0
      %1211 = vmatprep.subr.mxu0 0.0
      %1212 = vmatpush1.msra.mxu0 0.0
      %1213 = vmatprep.subr.mxu0 0.0
      %1214 = vmatpush1.msra.mxu0 0.0
      %1215 = vmatprep.subr.mxu0 0.0
      %1216 = vmatpush1.msra.mxu0 0.0
      %1217 = vmatprep.subr.mxu0 0.0
      %1218 = vmatpush1.msra.mxu0 0.0
      %1219 = vmatprep.subr.mxu0 0.0
      %1220 = vmatpush1.msra.mxu0 0.0
      %1221 = vmatprep.subr.mxu0 0.0
      %1222 = vmatpush1.msra.mxu0 0.0
      %1223 = vmatprep.subr.mxu0 0.0
      %1224 = vmatpush1.msra.mxu0 %v570
      %1225 = vmatprep.subr.mxu0 0.0
      %1226 = vmatpush1.msra.mxu0 %v569
      %1227 = vmatprep.subr.mxu0 0.0
      %1228 = vmatpush1.msra.mxu0 %v568
      %1229 = vmatprep.subr.mxu0 0.0
      %1230 = vmatpush1.msra.mxu0 %v567
      %1231 = vmatprep.subr.mxu0 0.0
      %1232 = vmatpush2.msra.mxu0 0.0
      %1233 = vmatprep.subr.mxu0 0.0
      %1234 = vmatpush2.msra.mxu0 0.0
      %1235 = vmatprep.subr.mxu0 0.0
      %1236 = vmatpush2.msra.mxu0 0.0
      %1237 = vmatprep.subr.mxu0 0.0
      %1238 = vmatpush2.msra.mxu0 0.0
      %1239 = vmatprep.subr.mxu0 0.0
      %1240 = vmatpush2.msra.mxu0 0.0
      %1241 = vmatprep.subr.mxu0 0.0
      %1242 = vmatpush2.msra.mxu0 0.0
      %1243 = vmatprep.subr.mxu0 0.0
      %1244 = vmatpush2.msra.mxu0 0.0
      %1245 = vmatprep.subr.mxu0 0.0
      %1246 = vmatpush2.msra.mxu0 0.0
      %1247 = vmatprep.subr.mxu0 0.0
      %1248 = vmatpush2.msra.mxu0 0.0
      %1249 = vmatprep.subr.mxu0 0.0
      %1250 = vmatpush2.msra.mxu0 0.0
      %1251 = vmatprep.subr.mxu0 0.0
      %1252 = vmatpush2.msra.mxu0 0.0
      %1253 = vmatprep.subr.mxu0 0.0
      %1254 = vmatpush2.msra.mxu0 0.0
      %1255 = vmatprep.subr.mxu0 0.0
      %1256 = vmatpush2.msra.mxu0 0.0
      %1257 = vmatprep.subr.mxu0 0.0
      %1258 = vmatpush2.msra.mxu0 0.0
      %1259 = vmatprep.subr.mxu0 0.0
      %1260 = vmatpush2.msra.mxu0 0.0
      %1261 = vmatprep.subr.mxu0 0.0
      %1262 = vmatpush2.msra.mxu0 0.0
      %1263 = vmatprep.mubr.f32.mxu0 0.0
      %1264 = vmatmul.mubr.f32.gmra.mxu0 %v1197
      %v1265 = vpop.f32.mrf.mxu0
      %v1266 = vadd.f32 0.0, %v1265
      %v1267 = vpop.f32.mrf.mxu0
      %1268 = vdwg.mxu0
      %v1270 = vsel %vm203, %v1193, 0
      %1272 = vmatprep.subr.mxu0 0.0
      %1273 = vmatpush1.msra.mxu0 0.0
      %1274 = vmatprep.subr.mxu0 0.0
      %1275 = vmatpush1.msra.mxu0 0.0
      %1276 = vmatprep.subr.mxu0 0.0
      %1277 = vmatpush1.msra.mxu0 0.0
      %1278 = vmatprep.subr.mxu0 0.0
      %1279 = vmatpush1.msra.mxu0 0.0
      %1280 = vmatprep.subr.mxu0 0.0
      %1281 = vmatpush1.msra.mxu0 0.0
      %1282 = vmatprep.subr.mxu0 0.0
      %1283 = vmatpush1.msra.mxu0 0.0
      %1284 = vmatprep.subr.mxu0 0.0
      %1285 = vmatpush1.msra.mxu0 0.0
      %1286 = vmatprep.subr.mxu0 0.0
      %1287 = vmatpush1.msra.mxu0 0.0
      %1288 = vmatprep.subr.mxu0 0.0
      %1289 = vmatpush1.msra.mxu0 0.0
      %1290 = vmatprep.subr.mxu0 0.0
      %1291 = vmatpush1.msra.mxu0 0.0
      %1292 = vmatprep.subr.mxu0 0.0
      %1293 = vmatpush1.msra.mxu0 0.0
      %1294 = vmatprep.subr.mxu0 0.0
      %1295 = vmatpush1.msra.mxu0 0.0
      %1296 = vmatprep.subr.mxu0 0.0
      %1297 = vmatpush1.msra.mxu0 %v566
      %1298 = vmatprep.subr.mxu0 0.0
      %1299 = vmatpush1.msra.mxu0 %v565
      %1300 = vmatprep.subr.mxu0 0.0
      %1301 = vmatpush1.msra.mxu0 %v564
      %1302 = vmatprep.subr.mxu0 0.0
      %1303 = vmatpush1.msra.mxu0 %v563
      %1304 = vmatprep.subr.mxu0 0.0
      %1305 = vmatpush2.msra.mxu0 0.0
      %1306 = vmatprep.subr.mxu0 0.0
      %1307 = vmatpush2.msra.mxu0 0.0
      %1308 = vmatprep.subr.mxu0 0.0
      %1309 = vmatpush2.msra.mxu0 0.0
      %1310 = vmatprep.subr.mxu0 0.0
      %1311 = vmatpush2.msra.mxu0 0.0
      %1312 = vmatprep.subr.mxu0 0.0
      %1313 = vmatpush2.msra.mxu0 0.0
      %1314 = vmatprep.subr.mxu0 0.0
      %1315 = vmatpush2.msra.mxu0 0.0
      %1316 = vmatprep.subr.mxu0 0.0
      %1317 = vmatpush2.msra.mxu0 0.0
      %1318 = vmatprep.subr.mxu0 0.0
      %1319 = vmatpush2.msra.mxu0 0.0
      %1320 = vmatprep.subr.mxu0 0.0
      %1321 = vmatpush2.msra.mxu0 0.0
      %1322 = vmatprep.subr.mxu0 0.0
      %1323 = vmatpush2.msra.mxu0 0.0
      %1324 = vmatprep.subr.mxu0 0.0
      %1325 = vmatpush2.msra.mxu0 0.0
      %1326 = vmatprep.subr.mxu0 0.0
      %1327 = vmatpush2.msra.mxu0 0.0
      %1328 = vmatprep.subr.mxu0 0.0
      %1329 = vmatpush2.msra.mxu0 0.0
      %1330 = vmatprep.subr.mxu0 0.0
      %1331 = vmatpush2.msra.mxu0 0.0
      %1332 = vmatprep.subr.mxu0 0.0
      %1333 = vmatpush2.msra.mxu0 0.0
      %1334 = vmatprep.subr.mxu0 0.0
      %1335 = vmatpush2.msra.mxu0 0.0
      %1336 = vmatprep.mubr.f32.mxu0 0.0
      %1337 = vmatmul.mubr.f32.gmra.mxu0 %v1270
      %v1338 = vpop.f32.mrf.mxu0
      %v1339 = vadd.f32 %v1266, %v1338
      %v1340 = vpop.f32.mrf.mxu0
      %1341 = vdwg.mxu0
      %v1342 = vadd.f32 %v1339, %v571
      %v1343 = vxor.u32 %v1342, 2147483648
      %v1344 = vmul.f32 %v1343, 1.442695
      %v1345 = vpow.pop %v1344
      %v1346 = vadd.f32 %v1345, 1.0
      %v1347 = vrcp.pop %v1346
      %v1348 = vmul.f32 1.0, %v1347
      %v1349 = vtanh.pop %v1342
      %v1351 = vlaneseq
      %v1352 = vshrl.u32 %v1351, 7
      %v1353 = vsub.s32 0, %v1352
      %v1354 = vrot.slane %v1195, %v1353
      %1355 = vrot.lane.b32.xlu0 %v1354, 32
      %v1356 = vpop.permute.xlu0 %1355
      %v1358 = vmul.f32 %v1348, %v1356
      %1360 = vrot.lane.b32.xlu0 %v1349, 64
      %v1361 = vpop.permute.xlu0 %1360
      %v1363 = vmul.f32 %v1348, %v1361
      %1365 = vrot.lane.b32.xlu0 %v1363, 32
      %v1366 = vpop.permute.xlu0 %1365
      %v1368 = vadd.f32 %v1358, %v1366
      %v1369 = vtanh.pop %v1368
      %1371 = vrot.lane.b32.xlu0 %v1369, 64
      %v1372 = vpop.permute.xlu0 %1371
      %v1374 = vmul.f32 %v1348, %v1372
      %1376 = vrot.lane.b32.xlu0 %v1374, 32
      %v1377 = vpop.permute.xlu0 %1376
      %1379 = vst.msk [vmem:[#allocation6] sm:$0x1] %vm589, %v1377
      %1381 = vrot.lane.b32.xlu0 %v1368, 96
      %v1382 = vpop.permute.xlu0 %1381
      %1384 = vst.msk [vmem:[#allocation7] sm:$0x1] %vm589, %v1382
      %v1385 = vld [vmem:[#allocation5] sm:$0xff]
      %v1386 = vld [vmem:[#allocation5 + $0x8] sm:$0xff]
      %v1387 = vld [vmem:[#allocation5 + $0x10] sm:$0xff]
      %v1388 = vld [vmem:[#allocation5 + $0x18] sm:$0xff]
      %v1389 = vld [vmem:[#allocation3] sm:$0xff]
      %v1390 = vld [vmem:[#allocation3 + $0x8] sm:$0xff]
      %v1391 = vld [vmem:[#allocation3 + $0x10] sm:$0xff]
      %v1392 = vld [vmem:[#allocation3 + $0x18] sm:$0xff]
      %v1393 = vld [vmem:[#allocation3 + $0x20] sm:$0xff]
      %v1394 = vld [vmem:[#allocation3 + $0x28] sm:$0xff]
      %v1395 = vld [vmem:[#allocation3 + $0x30] sm:$0xff]
      %v1396 = vld [vmem:[#allocation3 + $0x38] sm:$0xff]
      %v1397 = vlaneseq
      %v1398 = vshrl.u32 %v1397, 7
      %v1399 = vsub.s32 0, %v1398
      %v1400 = vrot.slane %v1374, %v1399
      %1402 = vrot.lane.b32.xlu0 %v1400, 32
      %v1403 = vpop.permute.xlu0 %1402
      %v1405 = vmul.f32 %v572, %v1403
      %v1406 = vmul.f32 %v573, %v1403
      %v1407 = vmul.f32 %v574, %v1403
      %v1408 = vmul.f32 %v575, %v1403
      %v1409 = vsel %vm203, %v1405, 0.0
      %1410 = vadd.xlane.f32.xlu0 %v1409
      %v1411 = vpop.xlane.xlu0 %1410
      %v1412 = vsel %vm203, %v1406, 0.0
      %1413 = vadd.xlane.f32.xlu0 %v1412
      %v1414 = vpop.xlane.xlu0 %1413
      %v1415 = vsel %vm203, %v1407, 0.0
      %1416 = vadd.xlane.f32.xlu0 %v1415
      %v1417 = vpop.xlane.xlu0 %1416
      %v1418 = vsel %vm203, %v1408, 0.0
      %1419 = vadd.xlane.f32.xlu0 %v1418
      %v1420 = vpop.xlane.xlu0 %1419
      %v1421 = vadd.f32 %v1385, %v1411
      %v1422 = vadd.f32 %v1386, %v1414
      %v1423 = vadd.f32 %v1387, %v1417
      %v1424 = vadd.f32 %v1388, %v1420
      %v1425 = vtanh.pop %v1421
      %v1426 = vtanh.pop %v1422
      %v1427 = vtanh.pop %v1423
      %v1428 = vtanh.pop %v1424
      %v1430 = vsel %vm203, %v580, 0
      %1432 = vmatprep.subr.mxu0 0.0
      %1433 = vmatpush1.msra.mxu0 0.0
      %1434 = vmatprep.subr.mxu0 0.0
      %1435 = vmatpush1.msra.mxu0 0.0
      %1436 = vmatprep.subr.mxu0 0.0
      %1437 = vmatpush1.msra.mxu0 0.0
      %1438 = vmatprep.subr.mxu0 0.0
      %1439 = vmatpush1.msra.mxu0 0.0
      %1440 = vmatprep.subr.mxu0 0.0
      %1441 = vmatpush1.msra.mxu0 0.0
      %1442 = vmatprep.subr.mxu0 0.0
      %1443 = vmatpush1.msra.mxu0 0.0
      %1444 = vmatprep.subr.mxu0 0.0
      %1445 = vmatpush1.msra.mxu0 0.0
      %1446 = vmatprep.subr.mxu0 0.0
      %1447 = vmatpush1.msra.mxu0 0.0
      %1448 = vmatprep.subr.mxu0 0.0
      %1449 = vmatpush1.msra.mxu0 0.0
      %1450 = vmatprep.subr.mxu0 0.0
      %1451 = vmatpush1.msra.mxu0 0.0
      %1452 = vmatprep.subr.mxu0 0.0
      %1453 = vmatpush1.msra.mxu0 0.0
      %1454 = vmatprep.subr.mxu0 0.0
      %1455 = vmatpush1.msra.mxu0 0.0
      %1456 = vmatprep.subr.mxu0 0.0
      %1457 = vmatpush1.msra.mxu0 %v1428
      %1458 = vmatprep.subr.mxu0 0.0
      %1459 = vmatpush1.msra.mxu0 %v1427
      %1460 = vmatprep.subr.mxu0 0.0
      %1461 = vmatpush1.msra.mxu0 %v1426
      %1462 = vmatprep.subr.mxu0 0.0
      %1463 = vmatpush1.msra.mxu0 %v1425
      %1464 = vmatprep.subr.mxu0 0.0
      %1465 = vmatpush2.msra.mxu0 0.0
      %1466 = vmatprep.subr.mxu0 0.0
      %1467 = vmatpush2.msra.mxu0 0.0
      %1468 = vmatprep.subr.mxu0 0.0
      %1469 = vmatpush2.msra.mxu0 0.0
      %1470 = vmatprep.subr.mxu0 0.0
      %1471 = vmatpush2.msra.mxu0 0.0
      %1472 = vmatprep.subr.mxu0 0.0
      %1473 = vmatpush2.msra.mxu0 0.0
      %1474 = vmatprep.subr.mxu0 0.0
      %1475 = vmatpush2.msra.mxu0 0.0
      %1476 = vmatprep.subr.mxu0 0.0
      %1477 = vmatpush2.msra.mxu0 0.0
      %1478 = vmatprep.subr.mxu0 0.0
      %1479 = vmatpush2.msra.mxu0 0.0
      %1480 = vmatprep.subr.mxu0 0.0
      %1481 = vmatpush2.msra.mxu0 0.0
      %1482 = vmatprep.subr.mxu0 0.0
      %1483 = vmatpush2.msra.mxu0 0.0
      %1484 = vmatprep.subr.mxu0 0.0
      %1485 = vmatpush2.msra.mxu0 0.0
      %1486 = vmatprep.subr.mxu0 0.0
      %1487 = vmatpush2.msra.mxu0 0.0
      %1488 = vmatprep.subr.mxu0 0.0
      %1489 = vmatpush2.msra.mxu0 0.0
      %1490 = vmatprep.subr.mxu0 0.0
      %1491 = vmatpush2.msra.mxu0 0.0
      %1492 = vmatprep.subr.mxu0 0.0
      %1493 = vmatpush2.msra.mxu0 0.0
      %1494 = vmatprep.subr.mxu0 0.0
      %1495 = vmatpush2.msra.mxu0 0.0
      %1496 = vmatprep.mubr.f32.mxu0 0.0
      %1497 = vmatmul.mubr.f32.gmra.mxu0 %v1430
      %v1498 = vpop.f32.mrf.mxu0
      %v1499 = vadd.f32 0.0, %v1498
      %v1500 = vpop.f32.mrf.mxu0
      %1501 = vdwg.mxu0
      %v1502 = vsel %vm104, %v1499, -1e+30
      %v1503 = vsel %vm595, %v1502, -inf
      %1504 = vmax.xlane.f32.xlu0 %v1503
      %v1505 = vpop.xlane.xlu0 %1504
      %v1506 = vsub.f32 %v1502, %v1505
      %v1507 = vmul.f32 %v1506, 1.442695
      %v1508 = vpow.pop %v1507
      %v1509 = vsel %vm104, %v1508, 0.0
      %v1510 = vsel %vm595, %v1509, 0.0
      %1511 = vadd.xlane.f32.xlu0 %v1510
      %v1512 = vpop.xlane.xlu0 %1511
      %v1513 = vrcp.pop %v1512
      %v1514 = vmul.f32 %v1509, %v1513
      %v1516 = vsel %vm554, %v1514, 0
      %1518 = vmatprep.subr.mxu0 0.0
      %1519 = vmatpush1.msra.mxu0 0.0
      %1520 = vmatprep.subr.mxu0 0.0
      %1521 = vmatpush1.msra.mxu0 0.0
      %1522 = vmatprep.subr.mxu0 0.0
      %1523 = vmatpush1.msra.mxu0 0.0
      %1524 = vmatprep.subr.mxu0 0.0
      %1525 = vmatpush1.msra.mxu0 0.0
      %1526 = vmatprep.subr.mxu0 0.0
      %1527 = vmatpush1.msra.mxu0 0.0
      %1528 = vmatprep.subr.mxu0 0.0
      %1529 = vmatpush1.msra.mxu0 0.0
      %1530 = vmatprep.subr.mxu0 0.0
      %1531 = vmatpush1.msra.mxu0 0.0
      %1532 = vmatprep.subr.mxu0 0.0
      %1533 = vmatpush1.msra.mxu0 0.0
      %1534 = vmatprep.subr.mxu0 0.0
      %1535 = vmatpush1.msra.mxu0 %v1396
      %1536 = vmatprep.subr.mxu0 0.0
      %1537 = vmatpush1.msra.mxu0 %v1395
      %1538 = vmatprep.subr.mxu0 0.0
      %1539 = vmatpush1.msra.mxu0 %v1394
      %1540 = vmatprep.subr.mxu0 0.0
      %1541 = vmatpush1.msra.mxu0 %v1393
      %1542 = vmatprep.subr.mxu0 0.0
      %1543 = vmatpush1.msra.mxu0 %v1392
      %1544 = vmatprep.subr.mxu0 0.0
      %1545 = vmatpush1.msra.mxu0 %v1391
      %1546 = vmatprep.subr.mxu0 0.0
      %1547 = vmatpush1.msra.mxu0 %v1390
      %1548 = vmatprep.subr.mxu0 0.0
      %1549 = vmatpush1.msra.mxu0 %v1389
      %1550 = vmatprep.subr.mxu0 0.0
      %1551 = vmatpush2.msra.mxu0 0.0
      %1552 = vmatprep.subr.mxu0 0.0
      %1553 = vmatpush2.msra.mxu0 0.0
      %1554 = vmatprep.subr.mxu0 0.0
      %1555 = vmatpush2.msra.mxu0 0.0
      %1556 = vmatprep.subr.mxu0 0.0
      %1557 = vmatpush2.msra.mxu0 0.0
      %1558 = vmatprep.subr.mxu0 0.0
      %1559 = vmatpush2.msra.mxu0 0.0
      %1560 = vmatprep.subr.mxu0 0.0
      %1561 = vmatpush2.msra.mxu0 0.0
      %1562 = vmatprep.subr.mxu0 0.0
      %1563 = vmatpush2.msra.mxu0 0.0
      %1564 = vmatprep.subr.mxu0 0.0
      %1565 = vmatpush2.msra.mxu0 0.0
      %1566 = vmatprep.subr.mxu0 0.0
      %1567 = vmatpush2.msra.mxu0 0.0
      %1568 = vmatprep.subr.mxu0 0.0
      %1569 = vmatpush2.msra.mxu0 0.0
      %1570 = vmatprep.subr.mxu0 0.0
      %1571 = vmatpush2.msra.mxu0 0.0
      %1572 = vmatprep.subr.mxu0 0.0
      %1573 = vmatpush2.msra.mxu0 0.0
      %1574 = vmatprep.subr.mxu0 0.0
      %1575 = vmatpush2.msra.mxu0 0.0
      %1576 = vmatprep.subr.mxu0 0.0
      %1577 = vmatpush2.msra.mxu0 0.0
      %1578 = vmatprep.subr.mxu0 0.0
      %1579 = vmatpush2.msra.mxu0 0.0
      %1580 = vmatprep.subr.mxu0 0.0
      %1581 = vmatpush2.msra.mxu0 0.0
      %1582 = vmatprep.mubr.f32.mxu0 0.0
      %1583 = vmatmul.mubr.f32.gmra.mxu0 %v1516
      %v1584 = vpop.f32.mrf.mxu0
      %v1585 = vadd.f32 0.0, %v1584
      %v1586 = vpop.f32.mrf.mxu0
      %1587 = vdwg.mxu0
      %v1588 = vld [vmem:[#allocation4] sm:$0xff]
      %v1589 = vld [vmem:[#allocation4 + $0x8] sm:$0xff]
      %v1590 = vld [vmem:[#allocation4 + $0x10] sm:$0xff]
      %v1591 = vld [vmem:[#allocation4 + $0x18] sm:$0xff]
      %v1592 = vld [vmem:[#allocation2] sm:$0xff]
      %v1593 = vld [vmem:[#allocation2 + $0x8] sm:$0xff]
      %v1594 = vld [vmem:[#allocation2 + $0x10] sm:$0xff]
      %v1595 = vld [vmem:[#allocation2 + $0x18] sm:$0xff]
      %v1596 = vld [vmem:[#allocation2 + $0x20] sm:$0xff]
      %v1597 = vld [vmem:[#allocation2 + $0x28] sm:$0xff]
      %v1598 = vld [vmem:[#allocation2 + $0x30] sm:$0xff]
      %v1599 = vld [vmem:[#allocation2 + $0x38] sm:$0xff]
      %v1600 = vlaneseq
      %v1601 = vshrl.u32 %v1600, 7
      %v1602 = vsub.s32 0, %v1601
      %v1603 = vrot.slane %v1585, %v1602
      %v1604 = vmul.f32 %v576, %v1603
      %v1605 = vmul.f32 %v577, %v1603
      %v1606 = vmul.f32 %v578, %v1603
      %v1607 = vmul.f32 %v579, %v1603
      %v1608 = vsel %vm203, %v1604, 0.0
      %1609 = vadd.xlane.f32.xlu0 %v1608
      %v1610 = vpop.xlane.xlu0 %1609
      %v1611 = vsel %vm203, %v1605, 0.0
      %1612 = vadd.xlane.f32.xlu0 %v1611
      %v1613 = vpop.xlane.xlu0 %1612
      %v1614 = vsel %vm203, %v1606, 0.0
      %1615 = vadd.xlane.f32.xlu0 %v1614
      %v1616 = vpop.xlane.xlu0 %1615
      %v1617 = vsel %vm203, %v1607, 0.0
      %1618 = vadd.xlane.f32.xlu0 %v1617
      %v1619 = vpop.xlane.xlu0 %1618
      %v1620 = vadd.f32 %v1588, %v1610
      %v1621 = vadd.f32 %v1589, %v1613
      %v1622 = vadd.f32 %v1590, %v1616
      %v1623 = vadd.f32 %v1591, %v1619
      %v1624 = vtanh.pop %v1620
      %v1625 = vtanh.pop %v1621
      %v1626 = vtanh.pop %v1622
      %v1627 = vtanh.pop %v1623
      %v1629 = vsel %vm203, %v581, 0
      %1631 = vmatprep.subr.mxu0 0.0
      %1632 = vmatpush1.msra.mxu0 0.0
      %1633 = vmatprep.subr.mxu0 0.0
      %1634 = vmatpush1.msra.mxu0 0.0
      %1635 = vmatprep.subr.mxu0 0.0
      %1636 = vmatpush1.msra.mxu0 0.0
      %1637 = vmatprep.subr.mxu0 0.0
      %1638 = vmatpush1.msra.mxu0 0.0
      %1639 = vmatprep.subr.mxu0 0.0
      %1640 = vmatpush1.msra.mxu0 0.0
      %1641 = vmatprep.subr.mxu0 0.0
      %1642 = vmatpush1.msra.mxu0 0.0
      %1643 = vmatprep.subr.mxu0 0.0
      %1644 = vmatpush1.msra.mxu0 0.0
      %1645 = vmatprep.subr.mxu0 0.0
      %1646 = vmatpush1.msra.mxu0 0.0
      %1647 = vmatprep.subr.mxu0 0.0
      %1648 = vmatpush1.msra.mxu0 0.0
      %1649 = vmatprep.subr.mxu0 0.0
      %1650 = vmatpush1.msra.mxu0 0.0
      %1651 = vmatprep.subr.mxu0 0.0
      %1652 = vmatpush1.msra.mxu0 0.0
      %1653 = vmatprep.subr.mxu0 0.0
      %1654 = vmatpush1.msra.mxu0 0.0
      %1655 = vmatprep.subr.mxu0 0.0
      %1656 = vmatpush1.msra.mxu0 %v1627
      %1657 = vmatprep.subr.mxu0 0.0
      %1658 = vmatpush1.msra.mxu0 %v1626
      %1659 = vmatprep.subr.mxu0 0.0
      %1660 = vmatpush1.msra.mxu0 %v1625
      %1661 = vmatprep.subr.mxu0 0.0
      %1662 = vmatpush1.msra.mxu0 %v1624
      %1663 = vmatprep.subr.mxu0 0.0
      %1664 = vmatpush2.msra.mxu0 0.0
      %1665 = vmatprep.subr.mxu0 0.0
      %1666 = vmatpush2.msra.mxu0 0.0
      %1667 = vmatprep.subr.mxu0 0.0
      %1668 = vmatpush2.msra.mxu0 0.0
      %1669 = vmatprep.subr.mxu0 0.0
      %1670 = vmatpush2.msra.mxu0 0.0
      %1671 = vmatprep.subr.mxu0 0.0
      %1672 = vmatpush2.msra.mxu0 0.0
      %1673 = vmatprep.subr.mxu0 0.0
      %1674 = vmatpush2.msra.mxu0 0.0
      %1675 = vmatprep.subr.mxu0 0.0
      %1676 = vmatpush2.msra.mxu0 0.0
      %1677 = vmatprep.subr.mxu0 0.0
      %1678 = vmatpush2.msra.mxu0 0.0
      %1679 = vmatprep.subr.mxu0 0.0
      %1680 = vmatpush2.msra.mxu0 0.0
      %1681 = vmatprep.subr.mxu0 0.0
      %1682 = vmatpush2.msra.mxu0 0.0
      %1683 = vmatprep.subr.mxu0 0.0
      %1684 = vmatpush2.msra.mxu0 0.0
      %1685 = vmatprep.subr.mxu0 0.0
      %1686 = vmatpush2.msra.mxu0 0.0
      %1687 = vmatprep.subr.mxu0 0.0
      %1688 = vmatpush2.msra.mxu0 0.0
      %1689 = vmatprep.subr.mxu0 0.0
      %1690 = vmatpush2.msra.mxu0 0.0
      %1691 = vmatprep.subr.mxu0 0.0
      %1692 = vmatpush2.msra.mxu0 0.0
      %1693 = vmatprep.subr.mxu0 0.0
      %1694 = vmatpush2.msra.mxu0 0.0
      %1695 = vmatprep.mubr.f32.mxu0 0.0
      %1696 = vmatmul.mubr.f32.gmra.mxu0 %v1629
      %v1697 = vpop.f32.mrf.mxu0
      %v1698 = vadd.f32 0.0, %v1697
      %v1699 = vpop.f32.mrf.mxu0
      %1700 = vdwg.mxu0
      %v1701 = vsel %vm104, %v1698, -1e+30
      %v1702 = vsel %vm595, %v1701, -inf
      %1703 = vmax.xlane.f32.xlu0 %v1702
      %v1704 = vpop.xlane.xlu0 %1703
      %v1705 = vsub.f32 %v1701, %v1704
      %v1706 = vmul.f32 %v1705, 1.442695
      %v1707 = vpow.pop %v1706
      %v1708 = vsel %vm104, %v1707, 0.0
      %v1709 = vsel %vm595, %v1708, 0.0
      %1710 = vadd.xlane.f32.xlu0 %v1709
      %v1711 = vpop.xlane.xlu0 %1710
      %v1712 = vrcp.pop %v1711
      %v1713 = vmul.f32 %v1708, %v1712
      %v1715 = vsel %vm554, %v1713, 0
      %1717 = vmatprep.subr.mxu0 0.0
      %1718 = vmatpush1.msra.mxu0 0.0
      %1719 = vmatprep.subr.mxu0 0.0
      %1720 = vmatpush1.msra.mxu0 0.0
      %1721 = vmatprep.subr.mxu0 0.0
      %1722 = vmatpush1.msra.mxu0 0.0
      %1723 = vmatprep.subr.mxu0 0.0
      %1724 = vmatpush1.msra.mxu0 0.0
      %1725 = vmatprep.subr.mxu0 0.0
      %1726 = vmatpush1.msra.mxu0 0.0
      %1727 = vmatprep.subr.mxu0 0.0
      %1728 = vmatpush1.msra.mxu0 0.0
      %1729 = vmatprep.subr.mxu0 0.0
      %1730 = vmatpush1.msra.mxu0 0.0
      %1731 = vmatprep.subr.mxu0 0.0
      %1732 = vmatpush1.msra.mxu0 0.0
      %1733 = vmatprep.subr.mxu0 0.0
      %1734 = vmatpush1.msra.mxu0 %v1599
      %1735 = vmatprep.subr.mxu0 0.0
      %1736 = vmatpush1.msra.mxu0 %v1598
      %1737 = vmatprep.subr.mxu0 0.0
      %1738 = vmatpush1.msra.mxu0 %v1597
      %1739 = vmatprep.subr.mxu0 0.0
      %1740 = vmatpush1.msra.mxu0 %v1596
      %1741 = vmatprep.subr.mxu0 0.0
      %1742 = vmatpush1.msra.mxu0 %v1595
      %1743 = vmatprep.subr.mxu0 0.0
      %1744 = vmatpush1.msra.mxu0 %v1594
      %1745 = vmatprep.subr.mxu0 0.0
      %1746 = vmatpush1.msra.mxu0 %v1593
      %1747 = vmatprep.subr.mxu0 0.0
      %1748 = vmatpush1.msra.mxu0 %v1592
      %1749 = vmatprep.subr.mxu0 0.0
      %1750 = vmatpush2.msra.mxu0 0.0
      %1751 = vmatprep.subr.mxu0 0.0
      %1752 = vmatpush2.msra.mxu0 0.0
      %1753 = vmatprep.subr.mxu0 0.0
      %1754 = vmatpush2.msra.mxu0 0.0
      %1755 = vmatprep.subr.mxu0 0.0
      %1756 = vmatpush2.msra.mxu0 0.0
      %1757 = vmatprep.subr.mxu0 0.0
      %1758 = vmatpush2.msra.mxu0 0.0
      %1759 = vmatprep.subr.mxu0 0.0
      %1760 = vmatpush2.msra.mxu0 0.0
      %1761 = vmatprep.subr.mxu0 0.0
      %1762 = vmatpush2.msra.mxu0 0.0
      %1763 = vmatprep.subr.mxu0 0.0
      %1764 = vmatpush2.msra.mxu0 0.0
      %1765 = vmatprep.subr.mxu0 0.0
      %1766 = vmatpush2.msra.mxu0 0.0
      %1767 = vmatprep.subr.mxu0 0.0
      %1768 = vmatpush2.msra.mxu0 0.0
      %1769 = vmatprep.subr.mxu0 0.0
      %1770 = vmatpush2.msra.mxu0 0.0
      %1771 = vmatprep.subr.mxu0 0.0
      %1772 = vmatpush2.msra.mxu0 0.0
      %1773 = vmatprep.subr.mxu0 0.0
      %1774 = vmatpush2.msra.mxu0 0.0
      %1775 = vmatprep.subr.mxu0 0.0
      %1776 = vmatpush2.msra.mxu0 0.0
      %1777 = vmatprep.subr.mxu0 0.0
      %1778 = vmatpush2.msra.mxu0 0.0
      %1779 = vmatprep.subr.mxu0 0.0
      %1780 = vmatpush2.msra.mxu0 0.0
      %1781 = vmatprep.mubr.f32.mxu0 0.0
      %1782 = vmatmul.mubr.f32.gmra.mxu0 %v1715
      %v1783 = vpop.f32.mrf.mxu0
      %v1784 = vadd.f32 0.0, %v1783
      %v1785 = vpop.f32.mrf.mxu0
      %1786 = vdwg.mxu0
      %v1788 = vsel %vm203, %v1784, 0
      %1790 = vmatprep.subr.mxu0 0.0
      %1791 = vmatpush1.msra.mxu0 0.0
      %1792 = vmatprep.subr.mxu0 0.0
      %1793 = vmatpush1.msra.mxu0 0.0
      %1794 = vmatprep.subr.mxu0 0.0
      %1795 = vmatpush1.msra.mxu0 0.0
      %1796 = vmatprep.subr.mxu0 0.0
      %1797 = vmatpush1.msra.mxu0 0.0
      %1798 = vmatprep.subr.mxu0 0.0
      %1799 = vmatpush1.msra.mxu0 0.0
      %1800 = vmatprep.subr.mxu0 0.0
      %1801 = vmatpush1.msra.mxu0 0.0
      %1802 = vmatprep.subr.mxu0 0.0
      %1803 = vmatpush1.msra.mxu0 0.0
      %1804 = vmatprep.subr.mxu0 0.0
      %1805 = vmatpush1.msra.mxu0 0.0
      %1806 = vmatprep.subr.mxu0 0.0
      %1807 = vmatpush1.msra.mxu0 0.0
      %1808 = vmatprep.subr.mxu0 0.0
      %1809 = vmatpush1.msra.mxu0 0.0
      %1810 = vmatprep.subr.mxu0 0.0
      %1811 = vmatpush1.msra.mxu0 0.0
      %1812 = vmatprep.subr.mxu0 0.0
      %1813 = vmatpush1.msra.mxu0 0.0
      %1814 = vmatprep.subr.mxu0 0.0
      %1815 = vmatpush1.msra.mxu0 %v585
      %1816 = vmatprep.subr.mxu0 0.0
      %1817 = vmatpush1.msra.mxu0 %v584
      %1818 = vmatprep.subr.mxu0 0.0
      %1819 = vmatpush1.msra.mxu0 %v583
      %1820 = vmatprep.subr.mxu0 0.0
      %1821 = vmatpush1.msra.mxu0 %v582
      %1822 = vmatprep.subr.mxu0 0.0
      %1823 = vmatpush2.msra.mxu0 0.0
      %1824 = vmatprep.subr.mxu0 0.0
      %1825 = vmatpush2.msra.mxu0 0.0
      %1826 = vmatprep.subr.mxu0 0.0
      %1827 = vmatpush2.msra.mxu0 0.0
      %1828 = vmatprep.subr.mxu0 0.0
      %1829 = vmatpush2.msra.mxu0 0.0
      %1830 = vmatprep.subr.mxu0 0.0
      %1831 = vmatpush2.msra.mxu0 0.0
      %1832 = vmatprep.subr.mxu0 0.0
      %1833 = vmatpush2.msra.mxu0 0.0
      %1834 = vmatprep.subr.mxu0 0.0
      %1835 = vmatpush2.msra.mxu0 0.0
      %1836 = vmatprep.subr.mxu0 0.0
      %1837 = vmatpush2.msra.mxu0 0.0
      %1838 = vmatprep.subr.mxu0 0.0
      %1839 = vmatpush2.msra.mxu0 0.0
      %1840 = vmatprep.subr.mxu0 0.0
      %1841 = vmatpush2.msra.mxu0 0.0
      %1842 = vmatprep.subr.mxu0 0.0
      %1843 = vmatpush2.msra.mxu0 0.0
      %1844 = vmatprep.subr.mxu0 0.0
      %1845 = vmatpush2.msra.mxu0 0.0
      %1846 = vmatprep.subr.mxu0 0.0
      %1847 = vmatpush2.msra.mxu0 0.0
      %1848 = vmatprep.subr.mxu0 0.0
      %1849 = vmatpush2.msra.mxu0 0.0
      %1850 = vmatprep.subr.mxu0 0.0
      %1851 = vmatpush2.msra.mxu0 0.0
      %1852 = vmatprep.subr.mxu0 0.0
      %1853 = vmatpush2.msra.mxu0 0.0
      %1854 = vmatprep.mubr.f32.mxu0 0.0
      %1855 = vmatmul.mubr.f32.gmra.mxu0 %v1788
      %v1856 = vpop.f32.mrf.mxu0
      %v1857 = vadd.f32 %v586, %v1856
      %v1858 = vpop.f32.mrf.mxu0
      %1859 = vdwg.mxu0
      %vm1860 = vcmask 0
      %1861 = vst.msk [vmem:[#allocation11] sm:$0x1] %vm1860, %v1857
      %v1862 = vld [vmem:[#allocation11] sm:$0x1]
      %s1863 = vtos %v1862
      %s1864 = scalar_lea.smem [#allocation20], %s1188
      %1865 = sst [smem:[%s1864]] %s1863
      %1866 = vst.msk [vmem:[#allocation8] sm:$0x1] %vm589, %v1784
    $region109: #{tpu_custom_call.1} parent=1 // loop_footer
      %s1190 = sadd.s32 %s1188, 1
    $region110: #{tpu_custom_call.1} parent=1 // loop_footer_branch
      %1187 = sbr.rel target = $region106
    $region111: #{tpu_custom_call.1} parent=1 // loop_exit
      _
    // Predicated region
    $region112: #{tpu_custom_call.1} parent=1 // pred_check
      _
    $region113: #{tpu_custom_call.1} parent=1 // pred_check_branch
      %1868 = sbr.rel (0) target = $region115
    $region114: #{tpu_custom_call.1} parent=1 // pred_region
      %s1870 = ssub.s32 16, 16
      %1871 = vsyncadd [#allocation15], %s1870
      %1874 = dma.smem_to_hbm [#allocation17], 16, %s23, [#allocation15]
    $region115: #{tpu_custom_call.1} parent=1 // pred_fallthru
      _
    // Predicated region
    $region116: #{tpu_custom_call.1} parent=1 // pred_check
      _
    $region117: #{tpu_custom_call.1} parent=1 // pred_check_branch
      %1876 = sbr.rel (0) target = $region119
    $region118: #{tpu_custom_call.1} parent=1 // pred_region
      %s1878 = ssub.s32 16, 16
      %1879 = vsyncadd [#allocation19], %s1878
      %1882 = dma.smem_to_hbm [#allocation18], 16, %s24, [#allocation19]
    $region119: #{tpu_custom_call.1} parent=1 // pred_fallthru
      _
    // Predicated region
    $region120: #{tpu_custom_call.1} parent=1 // pred_check
      _
    $region121: #{tpu_custom_call.1} parent=1 // pred_check_branch
      %1884 = sbr.rel (0) target = $region123
    $region122: #{tpu_custom_call.1} parent=1 // pred_region
      %s1886 = ssub.s32 16, 16
      %1887 = vsyncadd [#allocation19], %s1886
      %1890 = dma.smem_to_hbm [#allocation20], 16, %s25, [#allocation19]
    $region123: #{tpu_custom_call.1} parent=1 // pred_fallthru
      _
    // Predicated region
    $region124: #{tpu_custom_call.1} parent=1 // pred_check
      _
    $region125: #{tpu_custom_call.1} parent=1 // pred_check_branch
      %1892 = sbr.rel (0) target = $region127
    $region126: #{tpu_custom_call.1} parent=1 // pred_region
      %1893 = dma.done [#allocation15], 16
    $region127: #{tpu_custom_call.1} parent=1 // pred_fallthru
      _
    // Predicated region
    $region128: #{tpu_custom_call.1} parent=1 // pred_check
      _
    $region129: #{tpu_custom_call.1} parent=1 // pred_check_branch
      %1895 = sbr.rel (0) target = $region131
    $region130: #{tpu_custom_call.1} parent=1 // pred_region
      %1896 = dma.done [#allocation19], 16
    $region131: #{tpu_custom_call.1} parent=1 // pred_fallthru
      _
    // Predicated region
    $region132: #{tpu_custom_call.1} parent=1 // pred_check
      _
    $region133: #{tpu_custom_call.1} parent=1 // pred_check_branch
      %1898 = sbr.rel (0) target = $region135
    $region134: #{tpu_custom_call.1} parent=1 // pred_region
      %1899 = dma.done [#allocation19], 16
    $region135: #{tpu_custom_call.1} parent=1 // pred_fallthru
      _
    %1900 = sfence
    %1901 = vsyncpa [#allocation15], 1
    %1902 = vsyncpa [#allocation19], 1
    %1903 = vsyncpa [#allocation16], 1

</llo_original>
